<compile_context>
chip_gen: v7x
topology: tpu7x:2x2x1
jax: 0.10.0
libtpu: 0.0.40
codegen_flags: <defaults>
</compile_context>

<pallas_src>
import functools
import math

import jax
import jax.numpy as jnp
from jax import lax
from jax.experimental import pallas as pl
from jax.experimental.pallas import tpu as pltpu


# --------------------------------------------------------------------------
# Helpers
# --------------------------------------------------------------------------
_GELU_K1 = 0.7978845608028654            # sqrt(2/pi)
_GELU_K2 = 0.7978845608028654 * 0.044715


def _gelu_tanh(x):
    # nn.GELU(approximate='tanh'), rewritten to minimize VPU ops:
    #   x * (0.5 + 0.5*tanh(x*(k1 + k2*x*x)))
    return x * (0.5 + 0.5 * jnp.tanh(x * (_GELU_K1 + _GELU_K2 * (x * x))))


# --------------------------------------------------------------------------
# Pallas kernel
# --------------------------------------------------------------------------
def _diffusion_kernel(c1_ref, x_ref, w1_ref, b1_ref, w2s_ref, b2s_ref, o_ref, *,
                      num_steps, chunk, c1_static):
    """Full reverse-diffusion loop on one lane-dense (B, C, tile_hw) block.

    c1_ref : VMEM (S, 1)      f32  -- per-step 1/sqrt(alpha_t)  (reversed-t order)
    x_ref  : VMEM (B, C, T)        -- pixels on lanes, channels on sublanes
    w1_ref : VMEM (Hd, C)     bf16 -- first 1x1-conv weight
    b1_ref : VMEM (Hd, 1)     f32
    w2s_ref: VMEM (S, C, Hd)  bf16 -- per-step c2_t * W2
    b2s_ref: VMEM (S, C, 1)   f32  -- per-step c2_t * b2
    o_ref  : VMEM (B, C, T)
    c1_static: tuple of Python floats (short schedules) or None (rolled loop).
    """
    w1 = w1_ref[...]                       # (Hd, C) bf16, resident for all steps
    b1 = b1_ref[...]                       # (Hd, 1) f32
    B, _, T = x_ref.shape
    n_chunks = T // chunk

    def step(s, xt, c1):
        # conv1 (K = C) on the MXU: bf16 operands, f32 accumulation.
        h = jnp.dot(w1, xt.astype(jnp.bfloat16),
                    preferred_element_type=jnp.float32) + b1            # (Hd, chunk)
        h = _gelu_tanh(h)                                               # f32 VPU/EUP
        # conv2 (K = Hd) on the MXU; c2 already folded into w2s/b2s.
        eps = jnp.dot(w2s_ref[s], h.astype(jnp.bfloat16),
                      preferred_element_type=jnp.float32) + b2s_ref[s]  # (C, chunk)
        return c1 * xt - eps                                            # x_{t-1}

    def run_chunk(xt):
        if c1_static is not None:
            # Short schedule: fully unrolled, c1 baked as trace-time constants.
            for s in range(num_steps):
                xt = step(s, xt, c1_static[s])
            return xt
        # Long schedule: rolled loop, per-step scalars/weights read from refs.
        return lax.fori_loop(0, num_steps,
                             lambda s, x_c: step(s, x_c, c1_ref[s]),
                             xt, unroll=2)

    # Batch is merged into the block; samples / pixel chunks are independent,
    # so each (b, chunk) slice keeps x_t register-resident across ALL steps.
    for b in range(B):
        for j in range(n_chunks):
            lo, hi = j * chunk, (j + 1) * chunk
            xt = x_ref[b, :, lo:hi].astype(jnp.float32)                 # (C, chunk)
            o_ref[b, :, lo:hi] = run_chunk(xt).astype(o_ref.dtype)


# --------------------------------------------------------------------------
# Schedule (trace-time Python constants, reversed-t order)
# --------------------------------------------------------------------------
def _schedule_coefs(timesteps, num_steps):
    if timesteps > 1:
        betas = [1e-4 + (0.02 - 1e-4) * i / (timesteps - 1) for i in range(timesteps)]
    else:
        betas = [1e-4]
    abar = 1.0
    per_t = []
    for b in betas:
        a = 1.0 - b
        abar *= a
        c1 = 1.0 / math.sqrt(a)                           # 1/sqrt(alpha_t)
        c2 = b / (math.sqrt(1.0 - abar) * math.sqrt(a))   # beta_t/(sqrt(1-abar_t)*sqrt(alpha_t))
        per_t.append((c1, c2))
    return tuple(per_t[t] for t in reversed(range(num_steps)))


# --------------------------------------------------------------------------
# Wrapper
# --------------------------------------------------------------------------
def multi_channel_diffusion_block(x, params, *, timesteps, num_steps=None,
                                  tile_hw_max=2048, chunk=512,
                                  max_unrolled_steps=16):
    """x: [B, C, H, W] (NCHW, like the PyTorch module). Returns same shape/dtype."""
    if num_steps is None:
        num_steps = timesteps            # forward() uses num_steps = self.timesteps
    w1, b1, w2, b2 = params
    B, C, H, W = x.shape
    Hd = w1.shape[0]
    HW = H * W

    # Native [B, C, H*W] view: pure reshape, no HBM transpose.
    x_flat = x.reshape(B, C, HW)

    # ---- lane-dense tiling of the pixel axis ------------------------------
    hw128 = pl.cdiv(HW, 128) * 128
    # Keep >= 2 grid steps when the image allows it (both v7x TCs get work);
    # costs at most one extra ~0.35us step on single-TC v5e/v6e -- negligible.
    want_tiles = 2 if hw128 >= 256 else 1
    tile_hw = max(128, min(tile_hw_max, (hw128 // want_tiles // 128) * 128))
    if tile_hw >= chunk:
        tile_hw = (tile_hw // chunk) * chunk     # in-kernel chunks tile exactly
        chunk_k = chunk
    else:
        chunk_k = tile_hw
    n_tiles = pl.cdiv(hw128, tile_hw)
    HWp = n_tiles * tile_hw
    if HWp != HW:
        # Padded pixels run the loop on zeros (harmless); sliced off below.
        x_flat = jnp.pad(x_flat, ((0, 0), (0, 0), (0, HWp - HW)))

    # ---- schedule: fold c2 into per-step conv2 weights/bias ---------------
    coefs = _schedule_coefs(timesteps, num_steps)              # reversed-t order
    c1_list = [c1 for c1, _ in coefs]
    c2s = jnp.asarray([c2 for _, c2 in coefs], jnp.float32)                      # (S,)
    w1_bf = w1.astype(jnp.bfloat16)                                              # (Hd, C)
    b1_f = b1.astype(jnp.float32)                                                # (Hd, 1)
    w2s_bf = (c2s[:, None, None] * w2[None].astype(jnp.float32)).astype(jnp.bfloat16)  # (S, C, Hd)
    b2s_f = c2s[:, None, None] * b2[None].astype(jnp.float32)                    # (S, C, 1)
    c1s = jnp.asarray(c1_list, jnp.float32).reshape(num_steps, 1)                # (S, 1)

    unroll_static = num_steps <= max_unrolled_steps
    c1_static = tuple(c1_list) if unroll_static else None

    cost = pl.CostEstimate(
        flops=4 * B * HWp * num_steps * C * Hd,
        transcendentals=B * HWp * num_steps * Hd,
        bytes_accessed=2 * B * C * HWp * x.dtype.itemsize
                       + 2 * num_steps * C * Hd + 4 * (Hd * C + Hd + num_steps * C),
    )

    kernel = functools.partial(_diffusion_kernel, num_steps=num_steps,
                               chunk=chunk_k, c1_static=c1_static)

    out_flat = pl.pallas_call(
        kernel,
        out_shape=jax.ShapeDtypeStruct((B, C, HWp), x.dtype),
        grid_spec=pltpu.PrefetchScalarGridSpec(
            num_scalar_prefetch=0,
            grid=(n_tiles,),
            in_specs=[
                pl.BlockSpec((num_steps, 1), lambda i: (0, 0)),          # c1 table
                pl.BlockSpec((B, C, tile_hw), lambda i: (0, 0, i)),      # x tile (batch merged)
                pl.BlockSpec((Hd, C), lambda i: (0, 0)),                 # w1 (bf16)
                pl.BlockSpec((Hd, 1), lambda i: (0, 0)),                 # b1
                pl.BlockSpec((num_steps, C, Hd), lambda i: (0, 0, 0)),   # c2_t * w2 (bf16)
                pl.BlockSpec((num_steps, C, 1), lambda i: (0, 0, 0)),    # c2_t * b2
            ],
            out_specs=pl.BlockSpec((B, C, tile_hw), lambda i: (0, 0, i)),
        ),
        compiler_params=pltpu.CompilerParams(
            dimension_semantics=("parallel",)),
        cost_estimate=cost,
        input_output_aliases={1: 0},      # reuse the padded-x HBM buffer for the output
    )(c1s, x_flat, w1_bf, b1_f, w2s_bf, b2s_f)

    if HWp != HW:
        out_flat = out_flat[:, :, :HW]
    return out_flat.reshape(B, C, H, W)


# --------------------------------------------------------------------------
# Deterministic parameter construction (1x1-conv layout weights)
# --------------------------------------------------------------------------
def init_params(key, channels, hidden):
    k1, k2, k3, k4 = jax.random.split(key, 4)
    w1 = jax.random.normal(k1, (hidden, channels), jnp.float32) / math.sqrt(channels)
    b1 = jax.random.normal(k2, (hidden, 1), jnp.float32) * 0.01
    w2 = jax.random.normal(k3, (channels, hidden), jnp.float32) / math.sqrt(hidden)
    b2 = jax.random.normal(k4, (channels, 1), jnp.float32) * 0.01
    return (w1, b1, w2, b2)


# --------------------------------------------------------------------------
# Pure-JAX f32 reference (module semantics)
# --------------------------------------------------------------------------
def reference_forward(x, params, coefs):
    w1, b1, w2, b2 = params
    B, C, H, W = x.shape
    xt = x.reshape(B, C, H * W).astype(jnp.float32)
    for c1, c2 in coefs:
        h = _gelu_tanh(jnp.einsum('hc,bcn->bhn', w1, xt) + b1[None])
        eps = jnp.einsum('ch,bhn->bcn', w2, h) + b2[None]
        xt = c1 * xt - c2 * eps
    return xt.reshape(B, C, H, W).astype(x.dtype)


# --------------------------------------------------------------------------
if __name__ == "__main__":
    # config implied by the module: multi-channel image input, small 1x1 denoiser
    B, C, H, W = 2, 4, 16, 16
    HIDDEN = 32
    TIMESTEPS = 4

    key = jax.random.PRNGKey(0)
    kx, kp = jax.random.split(key)
    x = jax.random.normal(kx, (B, C, H, W), jnp.float32)
    params = init_params(kp, C, HIDDEN)

    out = multi_channel_diffusion_block(x, params, timesteps=TIMESTEPS)
    out = jax.block_until_ready(out)

    ref = reference_forward(x, params, _schedule_coefs(TIMESTEPS, TIMESTEPS))
    assert out.shape == x.shape and out.dtype == x.dtype
    assert jnp.allclose(out, ref, rtol=2e-2, atol=2e-2), "mismatch vs reference"

    print("KERNEL_OK")
</pallas_src>

<mosaic_0001>
module attributes {stable_mosaic.version = 11 : i64} {
  func.func @_diffusion_kernel(%arg0: i32, %arg1: memref<4x1xf32, #tpu.memory_space<vmem>>, %arg2: memref<2x4x128xf32, #tpu.memory_space<vmem>>, %arg3: memref<32x4xbf16, #tpu.memory_space<vmem>>, %arg4: memref<32x1xf32, #tpu.memory_space<vmem>>, %arg5: memref<4x4x32xbf16, #tpu.memory_space<vmem>>, %arg6: memref<4x4x1xf32, #tpu.memory_space<vmem>>, %arg7: memref<2x4x128xf32, #tpu.memory_space<vmem>>) attributes {dimension_semantics = [#tpu.dimension_semantics<parallel>], iteration_bounds = array<i64: 2>, scalar_prefetch = 0 : i64, scratch_operands = 0 : i64, tpu.core_type = #tpu.core_type<tc>, window_params = [{pipeline_mode = #tpu.pipeline_mode<synchronous>, transform_indices = @transform_0, window_bounds = array<i64: 4, 1>}, {transform_indices = @transform_1, window_bounds = array<i64: 2, 4, 128>}, {pipeline_mode = #tpu.pipeline_mode<synchronous>, transform_indices = @transform_2, window_bounds = array<i64: 32, 4>}, {pipeline_mode = #tpu.pipeline_mode<synchronous>, transform_indices = @transform_3, window_bounds = array<i64: 32, 1>}, {pipeline_mode = #tpu.pipeline_mode<synchronous>, transform_indices = @transform_4, window_bounds = array<i64: 4, 4, 32>}, {pipeline_mode = #tpu.pipeline_mode<synchronous>, transform_indices = @transform_5, window_bounds = array<i64: 4, 4, 1>}, {transform_indices = @transform_6, window_bounds = array<i64: 2, 4, 128>}]} {
    %c0 = arith.constant 0 : index
    %c0_0 = arith.constant 0 : index
    %0 = vector.load %arg3[%c0, %c0_0] : memref<32x4xbf16, #tpu.memory_space<vmem>>, vector<32x4xbf16>
    %c0_1 = arith.constant 0 : index
    %c0_2 = arith.constant 0 : index
    %1 = vector.load %arg4[%c0_1, %c0_2] : memref<32x1xf32, #tpu.memory_space<vmem>>, vector<32x1xf32>
    %c0_3 = arith.constant 0 : index
    %c0_4 = arith.constant 0 : index
    %c0_5 = arith.constant 0 : index
    %2 = vector.load %arg2[%c0_3, %c0_4, %c0_5] : memref<2x4x128xf32, #tpu.memory_space<vmem>>, vector<1x4x128xf32>
    %3 = vector.shape_cast %2 : vector<1x4x128xf32> to vector<4x128xf32>
    %4 = arith.truncf %3 : vector<4x128xf32> to vector<4x128xbf16>
    %cst = arith.constant dense<0.000000e+00> : vector<32x128xf32>
    %5 = tpu.matmul %0, %4, %cst {dimension_numbers = #tpu.dot_dimension_numbers<[1], [0], [0], [1], [0, 0, 1, 1], [], []>} : vector<32x4xbf16>, vector<4x128xbf16>, vector<32x128xf32> -> vector<32x128xf32>
    %6 = vector.broadcast %1 : vector<32x1xf32> to vector<32x128xf32>
    %7 = arith.addf %5, %6 : vector<32x128xf32>
    %8 = arith.mulf %7, %7 : vector<32x128xf32>
    %cst_6 = arith.constant 0.0356774069 : f32
    %9 = vector.broadcast %cst_6 : f32 to vector<32x128xf32>
    %10 = arith.mulf %9, %8 : vector<32x128xf32>
    %cst_7 = arith.constant 0.797884583 : f32
    %11 = vector.broadcast %cst_7 : f32 to vector<32x128xf32>
    %12 = arith.addf %11, %10 : vector<32x128xf32>
    %13 = arith.mulf %7, %12 : vector<32x128xf32>
    %14 = math.tanh %13 : vector<32x128xf32>
    %cst_8 = arith.constant 5.000000e-01 : f32
    %15 = vector.broadcast %cst_8 : f32 to vector<32x128xf32>
    %16 = arith.mulf %15, %14 : vector<32x128xf32>
    %cst_9 = arith.constant 5.000000e-01 : f32
    %17 = vector.broadcast %cst_9 : f32 to vector<32x128xf32>
    %18 = arith.addf %17, %16 : vector<32x128xf32>
    %19 = arith.mulf %7, %18 : vector<32x128xf32>
    %c0_10 = arith.constant 0 : index
    %c0_11 = arith.constant 0 : index
    %c0_12 = arith.constant 0 : index
    %20 = vector.load %arg5[%c0_10, %c0_11, %c0_12] : memref<4x4x32xbf16, #tpu.memory_space<vmem>>, vector<1x4x32xbf16>
    %21 = vector.shape_cast %20 : vector<1x4x32xbf16> to vector<4x32xbf16>
    %22 = arith.truncf %19 : vector<32x128xf32> to vector<32x128xbf16>
    %cst_13 = arith.constant dense<0.000000e+00> : vector<4x128xf32>
    %23 = tpu.matmul %21, %22, %cst_13 {dimension_numbers = #tpu.dot_dimension_numbers<[1], [0], [0], [1], [0, 0, 1, 1], [], []>} : vector<4x32xbf16>, vector<32x128xbf16>, vector<4x128xf32> -> vector<4x128xf32>
    %c0_14 = arith.constant 0 : index
    %c0_15 = arith.constant 0 : index
    %c0_16 = arith.constant 0 : index
    %24 = vector.load %arg6[%c0_14, %c0_15, %c0_16] : memref<4x4x1xf32, #tpu.memory_space<vmem>>, vector<1x4x1xf32>
    %25 = vector.shape_cast %24 : vector<1x4x1xf32> to vector<4x1xf32>
    %26 = vector.broadcast %25 : vector<4x1xf32> to vector<4x128xf32>
    %27 = arith.addf %23, %26 : vector<4x128xf32>
    %cst_17 = arith.constant 1.01015258 : f32
    %28 = vector.broadcast %cst_17 : f32 to vector<4x128xf32>
    %29 = arith.mulf %28, %3 : vector<4x128xf32>
    %30 = arith.subf %29, %27 : vector<4x128xf32>
    %31 = arith.truncf %30 : vector<4x128xf32> to vector<4x128xbf16>
    %cst_18 = arith.constant dense<0.000000e+00> : vector<32x128xf32>
    %32 = tpu.matmul %0, %31, %cst_18 {dimension_numbers = #tpu.dot_dimension_numbers<[1], [0], [0], [1], [0, 0, 1, 1], [], []>} : vector<32x4xbf16>, vector<4x128xbf16>, vector<32x128xf32> -> vector<32x128xf32>
    %33 = vector.broadcast %1 : vector<32x1xf32> to vector<32x128xf32>
    %34 = arith.addf %32, %33 : vector<32x128xf32>
    %35 = arith.mulf %34, %34 : vector<32x128xf32>
    %cst_19 = arith.constant 0.0356774069 : f32
    %36 = vector.broadcast %cst_19 : f32 to vector<32x128xf32>
    %37 = arith.mulf %36, %35 : vector<32x128xf32>
    %cst_20 = arith.constant 0.797884583 : f32
    %38 = vector.broadcast %cst_20 : f32 to vector<32x128xf32>
    %39 = arith.addf %38, %37 : vector<32x128xf32>
    %40 = arith.mulf %34, %39 : vector<32x128xf32>
    %41 = math.tanh %40 : vector<32x128xf32>
    %cst_21 = arith.constant 5.000000e-01 : f32
    %42 = vector.broadcast %cst_21 : f32 to vector<32x128xf32>
    %43 = arith.mulf %42, %41 : vector<32x128xf32>
    %cst_22 = arith.constant 5.000000e-01 : f32
    %44 = vector.broadcast %cst_22 : f32 to vector<32x128xf32>
    %45 = arith.addf %44, %43 : vector<32x128xf32>
    %46 = arith.mulf %34, %45 : vector<32x128xf32>
    %c1 = arith.constant 1 : index
    %c0_23 = arith.constant 0 : index
    %c0_24 = arith.constant 0 : index
    %47 = vector.load %arg5[%c1, %c0_23, %c0_24] : memref<4x4x32xbf16, #tpu.memory_space<vmem>>, vector<1x4x32xbf16>
    %48 = vector.shape_cast %47 : vector<1x4x32xbf16> to vector<4x32xbf16>
    %49 = arith.truncf %46 : vector<32x128xf32> to vector<32x128xbf16>
    %cst_25 = arith.constant dense<0.000000e+00> : vector<4x128xf32>
    %50 = tpu.matmul %48, %49, %cst_25 {dimension_numbers = #tpu.dot_dimension_numbers<[1], [0], [0], [1], [0, 0, 1, 1], [], []>} : vector<4x32xbf16>, vector<32x128xbf16>, vector<4x128xf32> -> vector<4x128xf32>
    %c1_26 = arith.constant 1 : index
    %c0_27 = arith.constant 0 : index
    %c0_28 = arith.constant 0 : index
    %51 = vector.load %arg6[%c1_26, %c0_27, %c0_28] : memref<4x4x1xf32, #tpu.memory_space<vmem>>, vector<1x4x1xf32>
    %52 = vector.shape_cast %51 : vector<1x4x1xf32> to vector<4x1xf32>
    %53 = vector.broadcast %52 : vector<4x1xf32> to vector<4x128xf32>
    %54 = arith.addf %50, %53 : vector<4x128xf32>
    %cst_29 = arith.constant 1.00675106 : f32
    %55 = vector.broadcast %cst_29 : f32 to vector<4x128xf32>
    %56 = arith.mulf %55, %30 : vector<4x128xf32>
    %57 = arith.subf %56, %54 : vector<4x128xf32>
    %58 = arith.truncf %57 : vector<4x128xf32> to vector<4x128xbf16>
    %cst_30 = arith.constant dense<0.000000e+00> : vector<32x128xf32>
    %59 = tpu.matmul %0, %58, %cst_30 {dimension_numbers = #tpu.dot_dimension_numbers<[1], [0], [0], [1], [0, 0, 1, 1], [], []>} : vector<32x4xbf16>, vector<4x128xbf16>, vector<32x128xf32> -> vector<32x128xf32>
    %60 = vector.broadcast %1 : vector<32x1xf32> to vector<32x128xf32>
    %61 = arith.addf %59, %60 : vector<32x128xf32>
    %62 = arith.mulf %61, %61 : vector<32x128xf32>
    %cst_31 = arith.constant 0.0356774069 : f32
    %63 = vector.broadcast %cst_31 : f32 to vector<32x128xf32>
    %64 = arith.mulf %63, %62 : vector<32x128xf32>
    %cst_32 = arith.constant 0.797884583 : f32
    %65 = vector.broadcast %cst_32 : f32 to vector<32x128xf32>
    %66 = arith.addf %65, %64 : vector<32x128xf32>
    %67 = arith.mulf %61, %66 : vector<32x128xf32>
    %68 = math.tanh %67 : vector<32x128xf32>
    %cst_33 = arith.constant 5.000000e-01 : f32
    %69 = vector.broadcast %cst_33 : f32 to vector<32x128xf32>
    %70 = arith.mulf %69, %68 : vector<32x128xf32>
    %cst_34 = arith.constant 5.000000e-01 : f32
    %71 = vector.broadcast %cst_34 : f32 to vector<32x128xf32>
    %72 = arith.addf %71, %70 : vector<32x128xf32>
    %73 = arith.mulf %61, %72 : vector<32x128xf32>
    %c2 = arith.constant 2 : index
    %c0_35 = arith.constant 0 : index
    %c0_36 = arith.constant 0 : index
    %74 = vector.load %arg5[%c2, %c0_35, %c0_36] : memref<4x4x32xbf16, #tpu.memory_space<vmem>>, vector<1x4x32xbf16>
    %75 = vector.shape_cast %74 : vector<1x4x32xbf16> to vector<4x32xbf16>
    %76 = arith.truncf %73 : vector<32x128xf32> to vector<32x128xbf16>
    %cst_37 = arith.constant dense<0.000000e+00> : vector<4x128xf32>
    %77 = tpu.matmul %75, %76, %cst_37 {dimension_numbers = #tpu.dot_dimension_numbers<[1], [0], [0], [1], [0, 0, 1, 1], [], []>} : vector<4x32xbf16>, vector<32x128xbf16>, vector<4x128xf32> -> vector<4x128xf32>
    %c2_38 = arith.constant 2 : index
    %c0_39 = arith.constant 0 : index
    %c0_40 = arith.constant 0 : index
    %78 = vector.load %arg6[%c2_38, %c0_39, %c0_40] : memref<4x4x1xf32, #tpu.memory_space<vmem>>, vector<1x4x1xf32>
    %79 = vector.shape_cast %78 : vector<1x4x1xf32> to vector<4x1xf32>
    %80 = vector.broadcast %79 : vector<4x1xf32> to vector<4x128xf32>
    %81 = arith.addf %77, %80 : vector<4x128xf32>
    %cst_41 = arith.constant 1.00338376 : f32
    %82 = vector.broadcast %cst_41 : f32 to vector<4x128xf32>
    %83 = arith.mulf %82, %57 : vector<4x128xf32>
    %84 = arith.subf %83, %81 : vector<4x128xf32>
    %85 = arith.truncf %84 : vector<4x128xf32> to vector<4x128xbf16>
    %cst_42 = arith.constant dense<0.000000e+00> : vector<32x128xf32>
    %86 = tpu.matmul %0, %85, %cst_42 {dimension_numbers = #tpu.dot_dimension_numbers<[1], [0], [0], [1], [0, 0, 1, 1], [], []>} : vector<32x4xbf16>, vector<4x128xbf16>, vector<32x128xf32> -> vector<32x128xf32>
    %87 = vector.broadcast %1 : vector<32x1xf32> to vector<32x128xf32>
    %88 = arith.addf %86, %87 : vector<32x128xf32>
    %89 = arith.mulf %88, %88 : vector<32x128xf32>
    %cst_43 = arith.constant 0.0356774069 : f32
    %90 = vector.broadcast %cst_43 : f32 to vector<32x128xf32>
    %91 = arith.mulf %90, %89 : vector<32x128xf32>
    %cst_44 = arith.constant 0.797884583 : f32
    %92 = vector.broadcast %cst_44 : f32 to vector<32x128xf32>
    %93 = arith.addf %92, %91 : vector<32x128xf32>
    %94 = arith.mulf %88, %93 : vector<32x128xf32>
    %95 = math.tanh %94 : vector<32x128xf32>
    %cst_45 = arith.constant 5.000000e-01 : f32
    %96 = vector.broadcast %cst_45 : f32 to vector<32x128xf32>
    %97 = arith.mulf %96, %95 : vector<32x128xf32>
    %cst_46 = arith.constant 5.000000e-01 : f32
    %98 = vector.broadcast %cst_46 : f32 to vector<32x128xf32>
    %99 = arith.addf %98, %97 : vector<32x128xf32>
    %100 = arith.mulf %88, %99 : vector<32x128xf32>
    %c3 = arith.constant 3 : index
    %c0_47 = arith.constant 0 : index
    %c0_48 = arith.constant 0 : index
    %101 = vector.load %arg5[%c3, %c0_47, %c0_48] : memref<4x4x32xbf16, #tpu.memory_space<vmem>>, vector<1x4x32xbf16>
    %102 = vector.shape_cast %101 : vector<1x4x32xbf16> to vector<4x32xbf16>
    %103 = arith.truncf %100 : vector<32x128xf32> to vector<32x128xbf16>
    %cst_49 = arith.constant dense<0.000000e+00> : vector<4x128xf32>
    %104 = tpu.matmul %102, %103, %cst_49 {dimension_numbers = #tpu.dot_dimension_numbers<[1], [0], [0], [1], [0, 0, 1, 1], [], []>} : vector<4x32xbf16>, vector<32x128xbf16>, vector<4x128xf32> -> vector<4x128xf32>
    %c3_50 = arith.constant 3 : index
    %c0_51 = arith.constant 0 : index
    %c0_52 = arith.constant 0 : index
    %105 = vector.load %arg6[%c3_50, %c0_51, %c0_52] : memref<4x4x1xf32, #tpu.memory_space<vmem>>, vector<1x4x1xf32>
    %106 = vector.shape_cast %105 : vector<1x4x1xf32> to vector<4x1xf32>
    %107 = vector.broadcast %106 : vector<4x1xf32> to vector<4x128xf32>
    %108 = arith.addf %104, %107 : vector<4x128xf32>
    %cst_53 = arith.constant 1.000050e+00 : f32
    %109 = vector.broadcast %cst_53 : f32 to vector<4x128xf32>
    %110 = arith.mulf %109, %84 : vector<4x128xf32>
    %111 = arith.subf %110, %108 : vector<4x128xf32>
    %c0_54 = arith.constant 0 : index
    %c0_55 = arith.constant 0 : index
    %c0_56 = arith.constant 0 : index
    %112 = vector.load %arg7[%c0_54, %c0_55, %c0_56] : memref<2x4x128xf32, #tpu.memory_space<vmem>>, vector<1x4x128xf32>
    %113 = vector.shape_cast %112 : vector<1x4x128xf32> to vector<4x128xf32>
    %114 = vector.shape_cast %111 : vector<4x128xf32> to vector<1x4x128xf32>
    tpu.vector_store %arg7[%c0_54, %c0_55, %c0_56], %114 {strides = array<i32>} : memref<2x4x128xf32, #tpu.memory_space<vmem>>, vector<1x4x128xf32>,
    %c1_57 = arith.constant 1 : index
    %c0_58 = arith.constant 0 : index
    %c0_59 = arith.constant 0 : index
    %115 = vector.load %arg2[%c1_57, %c0_58, %c0_59] : memref<2x4x128xf32, #tpu.memory_space<vmem>>, vector<1x4x128xf32>
    %116 = vector.shape_cast %115 : vector<1x4x128xf32> to vector<4x128xf32>
    %117 = arith.truncf %116 : vector<4x128xf32> to vector<4x128xbf16>
    %cst_60 = arith.constant dense<0.000000e+00> : vector<32x128xf32>
    %118 = tpu.matmul %0, %117, %cst_60 {dimension_numbers = #tpu.dot_dimension_numbers<[1], [0], [0], [1], [0, 0, 1, 1], [], []>} : vector<32x4xbf16>, vector<4x128xbf16>, vector<32x128xf32> -> vector<32x128xf32>
    %119 = vector.broadcast %1 : vector<32x1xf32> to vector<32x128xf32>
    %120 = arith.addf %118, %119 : vector<32x128xf32>
    %121 = arith.mulf %120, %120 : vector<32x128xf32>
    %cst_61 = arith.constant 0.0356774069 : f32
    %122 = vector.broadcast %cst_61 : f32 to vector<32x128xf32>
    %123 = arith.mulf %122, %121 : vector<32x128xf32>
    %cst_62 = arith.constant 0.797884583 : f32
    %124 = vector.broadcast %cst_62 : f32 to vector<32x128xf32>
    %125 = arith.addf %124, %123 : vector<32x128xf32>
    %126 = arith.mulf %120, %125 : vector<32x128xf32>
    %127 = math.tanh %126 : vector<32x128xf32>
    %cst_63 = arith.constant 5.000000e-01 : f32
    %128 = vector.broadcast %cst_63 : f32 to vector<32x128xf32>
    %129 = arith.mulf %128, %127 : vector<32x128xf32>
    %cst_64 = arith.constant 5.000000e-01 : f32
    %130 = vector.broadcast %cst_64 : f32 to vector<32x128xf32>
    %131 = arith.addf %130, %129 : vector<32x128xf32>
    %132 = arith.mulf %120, %131 : vector<32x128xf32>
    %c0_65 = arith.constant 0 : index
    %c0_66 = arith.constant 0 : index
    %c0_67 = arith.constant 0 : index
    %133 = vector.load %arg5[%c0_65, %c0_66, %c0_67] : memref<4x4x32xbf16, #tpu.memory_space<vmem>>, vector<1x4x32xbf16>
    %134 = vector.shape_cast %133 : vector<1x4x32xbf16> to vector<4x32xbf16>
    %135 = arith.truncf %132 : vector<32x128xf32> to vector<32x128xbf16>
    %cst_68 = arith.constant dense<0.000000e+00> : vector<4x128xf32>
    %136 = tpu.matmul %134, %135, %cst_68 {dimension_numbers = #tpu.dot_dimension_numbers<[1], [0], [0], [1], [0, 0, 1, 1], [], []>} : vector<4x32xbf16>, vector<32x128xbf16>, vector<4x128xf32> -> vector<4x128xf32>
    %c0_69 = arith.constant 0 : index
    %c0_70 = arith.constant 0 : index
    %c0_71 = arith.constant 0 : index
    %137 = vector.load %arg6[%c0_69, %c0_70, %c0_71] : memref<4x4x1xf32, #tpu.memory_space<vmem>>, vector<1x4x1xf32>
    %138 = vector.shape_cast %137 : vector<1x4x1xf32> to vector<4x1xf32>
    %139 = vector.broadcast %138 : vector<4x1xf32> to vector<4x128xf32>
    %140 = arith.addf %136, %139 : vector<4x128xf32>
    %cst_72 = arith.constant 1.01015258 : f32
    %141 = vector.broadcast %cst_72 : f32 to vector<4x128xf32>
    %142 = arith.mulf %141, %116 : vector<4x128xf32>
    %143 = arith.subf %142, %140 : vector<4x128xf32>
    %144 = arith.truncf %143 : vector<4x128xf32> to vector<4x128xbf16>
    %cst_73 = arith.constant dense<0.000000e+00> : vector<32x128xf32>
    %145 = tpu.matmul %0, %144, %cst_73 {dimension_numbers = #tpu.dot_dimension_numbers<[1], [0], [0], [1], [0, 0, 1, 1], [], []>} : vector<32x4xbf16>, vector<4x128xbf16>, vector<32x128xf32> -> vector<32x128xf32>
    %146 = vector.broadcast %1 : vector<32x1xf32> to vector<32x128xf32>
    %147 = arith.addf %145, %146 : vector<32x128xf32>
    %148 = arith.mulf %147, %147 : vector<32x128xf32>
    %cst_74 = arith.constant 0.0356774069 : f32
    %149 = vector.broadcast %cst_74 : f32 to vector<32x128xf32>
    %150 = arith.mulf %149, %148 : vector<32x128xf32>
    %cst_75 = arith.constant 0.797884583 : f32
    %151 = vector.broadcast %cst_75 : f32 to vector<32x128xf32>
    %152 = arith.addf %151, %150 : vector<32x128xf32>
    %153 = arith.mulf %147, %152 : vector<32x128xf32>
    %154 = math.tanh %153 : vector<32x128xf32>
    %cst_76 = arith.constant 5.000000e-01 : f32
    %155 = vector.broadcast %cst_76 : f32 to vector<32x128xf32>
    %156 = arith.mulf %155, %154 : vector<32x128xf32>
    %cst_77 = arith.constant 5.000000e-01 : f32
    %157 = vector.broadcast %cst_77 : f32 to vector<32x128xf32>
    %158 = arith.addf %157, %156 : vector<32x128xf32>
    %159 = arith.mulf %147, %158 : vector<32x128xf32>
    %c1_78 = arith.constant 1 : index
    %c0_79 = arith.constant 0 : index
    %c0_80 = arith.constant 0 : index
    %160 = vector.load %arg5[%c1_78, %c0_79, %c0_80] : memref<4x4x32xbf16, #tpu.memory_space<vmem>>, vector<1x4x32xbf16>
    %161 = vector.shape_cast %160 : vector<1x4x32xbf16> to vector<4x32xbf16>
    %162 = arith.truncf %159 : vector<32x128xf32> to vector<32x128xbf16>
    %cst_81 = arith.constant dense<0.000000e+00> : vector<4x128xf32>
    %163 = tpu.matmul %161, %162, %cst_81 {dimension_numbers = #tpu.dot_dimension_numbers<[1], [0], [0], [1], [0, 0, 1, 1], [], []>} : vector<4x32xbf16>, vector<32x128xbf16>, vector<4x128xf32> -> vector<4x128xf32>
    %c1_82 = arith.constant 1 : index
    %c0_83 = arith.constant 0 : index
    %c0_84 = arith.constant 0 : index
    %164 = vector.load %arg6[%c1_82, %c0_83, %c0_84] : memref<4x4x1xf32, #tpu.memory_space<vmem>>, vector<1x4x1xf32>
    %165 = vector.shape_cast %164 : vector<1x4x1xf32> to vector<4x1xf32>
    %166 = vector.broadcast %165 : vector<4x1xf32> to vector<4x128xf32>
    %167 = arith.addf %163, %166 : vector<4x128xf32>
    %cst_85 = arith.constant 1.00675106 : f32
    %168 = vector.broadcast %cst_85 : f32 to vector<4x128xf32>
    %169 = arith.mulf %168, %143 : vector<4x128xf32>
    %170 = arith.subf %169, %167 : vector<4x128xf32>
    %171 = arith.truncf %170 : vector<4x128xf32> to vector<4x128xbf16>
    %cst_86 = arith.constant dense<0.000000e+00> : vector<32x128xf32>
    %172 = tpu.matmul %0, %171, %cst_86 {dimension_numbers = #tpu.dot_dimension_numbers<[1], [0], [0], [1], [0, 0, 1, 1], [], []>} : vector<32x4xbf16>, vector<4x128xbf16>, vector<32x128xf32> -> vector<32x128xf32>
    %173 = vector.broadcast %1 : vector<32x1xf32> to vector<32x128xf32>
    %174 = arith.addf %172, %173 : vector<32x128xf32>
    %175 = arith.mulf %174, %174 : vector<32x128xf32>
    %cst_87 = arith.constant 0.0356774069 : f32
    %176 = vector.broadcast %cst_87 : f32 to vector<32x128xf32>
    %177 = arith.mulf %176, %175 : vector<32x128xf32>
    %cst_88 = arith.constant 0.797884583 : f32
    %178 = vector.broadcast %cst_88 : f32 to vector<32x128xf32>
    %179 = arith.addf %178, %177 : vector<32x128xf32>
    %180 = arith.mulf %174, %179 : vector<32x128xf32>
    %181 = math.tanh %180 : vector<32x128xf32>
    %cst_89 = arith.constant 5.000000e-01 : f32
    %182 = vector.broadcast %cst_89 : f32 to vector<32x128xf32>
    %183 = arith.mulf %182, %181 : vector<32x128xf32>
    %cst_90 = arith.constant 5.000000e-01 : f32
    %184 = vector.broadcast %cst_90 : f32 to vector<32x128xf32>
    %185 = arith.addf %184, %183 : vector<32x128xf32>
    %186 = arith.mulf %174, %185 : vector<32x128xf32>
    %c2_91 = arith.constant 2 : index
    %c0_92 = arith.constant 0 : index
    %c0_93 = arith.constant 0 : index
    %187 = vector.load %arg5[%c2_91, %c0_92, %c0_93] : memref<4x4x32xbf16, #tpu.memory_space<vmem>>, vector<1x4x32xbf16>
    %188 = vector.shape_cast %187 : vector<1x4x32xbf16> to vector<4x32xbf16>
    %189 = arith.truncf %186 : vector<32x128xf32> to vector<32x128xbf16>
    %cst_94 = arith.constant dense<0.000000e+00> : vector<4x128xf32>
    %190 = tpu.matmul %188, %189, %cst_94 {dimension_numbers = #tpu.dot_dimension_numbers<[1], [0], [0], [1], [0, 0, 1, 1], [], []>} : vector<4x32xbf16>, vector<32x128xbf16>, vector<4x128xf32> -> vector<4x128xf32>
    %c2_95 = arith.constant 2 : index
    %c0_96 = arith.constant 0 : index
    %c0_97 = arith.constant 0 : index
    %191 = vector.load %arg6[%c2_95, %c0_96, %c0_97] : memref<4x4x1xf32, #tpu.memory_space<vmem>>, vector<1x4x1xf32>
    %192 = vector.shape_cast %191 : vector<1x4x1xf32> to vector<4x1xf32>
    %193 = vector.broadcast %192 : vector<4x1xf32> to vector<4x128xf32>
    %194 = arith.addf %190, %193 : vector<4x128xf32>
    %cst_98 = arith.constant 1.00338376 : f32
    %195 = vector.broadcast %cst_98 : f32 to vector<4x128xf32>
    %196 = arith.mulf %195, %170 : vector<4x128xf32>
    %197 = arith.subf %196, %194 : vector<4x128xf32>
    %198 = arith.truncf %197 : vector<4x128xf32> to vector<4x128xbf16>
    %cst_99 = arith.constant dense<0.000000e+00> : vector<32x128xf32>
    %199 = tpu.matmul %0, %198, %cst_99 {dimension_numbers = #tpu.dot_dimension_numbers<[1], [0], [0], [1], [0, 0, 1, 1], [], []>} : vector<32x4xbf16>, vector<4x128xbf16>, vector<32x128xf32> -> vector<32x128xf32>
    %200 = vector.broadcast %1 : vector<32x1xf32> to vector<32x128xf32>
    %201 = arith.addf %199, %200 : vector<32x128xf32>
    %202 = arith.mulf %201, %201 : vector<32x128xf32>
    %cst_100 = arith.constant 0.0356774069 : f32
    %203 = vector.broadcast %cst_100 : f32 to vector<32x128xf32>
    %204 = arith.mulf %203, %202 : vector<32x128xf32>
    %cst_101 = arith.constant 0.797884583 : f32
    %205 = vector.broadcast %cst_101 : f32 to vector<32x128xf32>
    %206 = arith.addf %205, %204 : vector<32x128xf32>
    %207 = arith.mulf %201, %206 : vector<32x128xf32>
    %208 = math.tanh %207 : vector<32x128xf32>
    %cst_102 = arith.constant 5.000000e-01 : f32
    %209 = vector.broadcast %cst_102 : f32 to vector<32x128xf32>
    %210 = arith.mulf %209, %208 : vector<32x128xf32>
    %cst_103 = arith.constant 5.000000e-01 : f32
    %211 = vector.broadcast %cst_103 : f32 to vector<32x128xf32>
    %212 = arith.addf %211, %210 : vector<32x128xf32>
    %213 = arith.mulf %201, %212 : vector<32x128xf32>
    %c3_104 = arith.constant 3 : index
    %c0_105 = arith.constant 0 : index
    %c0_106 = arith.constant 0 : index
    %214 = vector.load %arg5[%c3_104, %c0_105, %c0_106] : memref<4x4x32xbf16, #tpu.memory_space<vmem>>, vector<1x4x32xbf16>
    %215 = vector.shape_cast %214 : vector<1x4x32xbf16> to vector<4x32xbf16>
    %216 = arith.truncf %213 : vector<32x128xf32> to vector<32x128xbf16>
    %cst_107 = arith.constant dense<0.000000e+00> : vector<4x128xf32>
    %217 = tpu.matmul %215, %216, %cst_107 {dimension_numbers = #tpu.dot_dimension_numbers<[1], [0], [0], [1], [0, 0, 1, 1], [], []>} : vector<4x32xbf16>, vector<32x128xbf16>, vector<4x128xf32> -> vector<4x128xf32>
    %c3_108 = arith.constant 3 : index
    %c0_109 = arith.constant 0 : index
    %c0_110 = arith.constant 0 : index
    %218 = vector.load %arg6[%c3_108, %c0_109, %c0_110] : memref<4x4x1xf32, #tpu.memory_space<vmem>>, vector<1x4x1xf32>
    %219 = vector.shape_cast %218 : vector<1x4x1xf32> to vector<4x1xf32>
    %220 = vector.broadcast %219 : vector<4x1xf32> to vector<4x128xf32>
    %221 = arith.addf %217, %220 : vector<4x128xf32>
    %cst_111 = arith.constant 1.000050e+00 : f32
    %222 = vector.broadcast %cst_111 : f32 to vector<4x128xf32>
    %223 = arith.mulf %222, %197 : vector<4x128xf32>
    %224 = arith.subf %223, %221 : vector<4x128xf32>
    %c1_112 = arith.constant 1 : index
    %c0_113 = arith.constant 0 : index
    %c0_114 = arith.constant 0 : index
    %225 = vector.load %arg7[%c1_112, %c0_113, %c0_114] : memref<2x4x128xf32, #tpu.memory_space<vmem>>, vector<1x4x128xf32>
    %226 = vector.shape_cast %225 : vector<1x4x128xf32> to vector<4x128xf32>
    %227 = vector.shape_cast %224 : vector<4x128xf32> to vector<1x4x128xf32>
    tpu.vector_store %arg7[%c1_112, %c0_113, %c0_114], %227 {strides = array<i32>} : memref<2x4x128xf32, #tpu.memory_space<vmem>>, vector<1x4x128xf32>,
    return
  }
  func.func @transform_0(%arg0: i32) -> (i32, i32) {
    %c0_i32 = arith.constant 0 : i32
    %c0_i32_0 = arith.constant 0 : i32
    %c0_i32_1 = arith.constant 0 : i32
    return %c0_i32, %c0_i32_0 : i32, i32
  }
  func.func @transform_1(%arg0: i32) -> (i32, i32, i32) {
    %c0_i32 = arith.constant 0 : i32
    %c0_i32_0 = arith.constant 0 : i32
    %c0_i32_1 = arith.constant 0 : i32
    return %c0_i32, %c0_i32_0, %arg0 : i32, i32, i32
  }
  func.func @transform_2(%arg0: i32) -> (i32, i32) {
    %c0_i32 = arith.constant 0 : i32
    %c0_i32_0 = arith.constant 0 : i32
    %c0_i32_1 = arith.constant 0 : i32
    return %c0_i32, %c0_i32_0 : i32, i32
  }
  func.func @transform_3(%arg0: i32) -> (i32, i32) {
    %c0_i32 = arith.constant 0 : i32
    %c0_i32_0 = arith.constant 0 : i32
    %c0_i32_1 = arith.constant 0 : i32
    return %c0_i32, %c0_i32_0 : i32, i32
  }
  func.func @transform_4(%arg0: i32) -> (i32, i32, i32) {
    %c0_i32 = arith.constant 0 : i32
    %c0_i32_0 = arith.constant 0 : i32
    %c0_i32_1 = arith.constant 0 : i32
    %c0_i32_2 = arith.constant 0 : i32
    return %c0_i32, %c0_i32_0, %c0_i32_1 : i32, i32, i32
  }
  func.func @transform_5(%arg0: i32) -> (i32, i32, i32) {
    %c0_i32 = arith.constant 0 : i32
    %c0_i32_0 = arith.constant 0 : i32
    %c0_i32_1 = arith.constant 0 : i32
    %c0_i32_2 = arith.constant 0 : i32
    return %c0_i32, %c0_i32_0, %c0_i32_1 : i32, i32, i32
  }
  func.func @transform_6(%arg0: i32) -> (i32, i32, i32) {
    %c0_i32 = arith.constant 0 : i32
    %c0_i32_0 = arith.constant 0 : i32
    %c0_i32_1 = arith.constant 0 : i32
    return %c0_i32, %c0_i32_0, %arg0 : i32, i32, i32
  }
}

</mosaic_0001>

<llo_original>
// kernel: tpu_custom_call.1
$region0: #{tpu_custom_call.1}
  #allocation0 [shape = 'u32[]', space=smem, size = 0x4, offset = 0x4, fixed_abs, tag = 'smem constant byte address 0x4 - core index']
  #allocation1 [shape = 'u32[144,128]{1,0:T(1,128)}', space=vmem, size = 0x12000, scoped, tag = 'internal scratch']
  %s0 = inlined_call_operand.vmem [shape: f32[4,1], index: 0, kind: input, shape index: {}]
  %s1 = inlined_call_operand.hbm [shape: f32[2,4,256], index: 1, kind: input, shape index: {}, may-alias: {1,6}]
  %s2 = inlined_call_operand.vmem [shape: bf16[32,4], index: 2, kind: input, shape index: {}]
  %s3 = inlined_call_operand.vmem [shape: f32[32,1], index: 3, kind: input, shape index: {}]
  %s4 = inlined_call_operand.vmem [shape: bf16[4,4,32], index: 4, kind: input, shape index: {}]
  %s5 = inlined_call_operand.vmem [shape: f32[4,4,1], index: 5, kind: input, shape index: {}]
  %s6 = inlined_call_operand.hbm [shape: f32[2,4,256], index: 6, kind: output, shape index: {}, may-alias: {1,6}]
  %s7 = sld [smem:[#allocation0]]
  $region61: #{tpu_custom_call.1} parent=0
    _
  %s9 = ssub.s32 1, %s7
  %s10 = scalar_select 0, %s9, %s7
  $region1: #{tpu_custom_call.1} parent=0
    #allocation2 [shape = 'u8[8192]{0}', space=vmem, size = 0x2000, scoped, tag = 'input window, operand 1']
    #allocation3 [shape = 's32[2]{0}', space=sflag, size = 0x8, scoped, tag = 'scoped memory for tpu_custom_call.1']
    #allocation4 [shape = 's32[2]{0}', space=sflag, size = 0x8, scoped, tag = 'scoped memory for tpu_custom_call.1']
    #allocation5 [shape = 'u8[8192]{0}', space=vmem, size = 0x2000, scoped, tag = 'output window, operand 0']
    %11 = vsyncpa [#allocation3], 0
    %s12 = scalar_lea.sflag [#allocation3], 1
    %13 = vsyncpa %s12, 0
    %14 = vsyncpa [#allocation4], 0
    %s15 = scalar_lea.sflag [#allocation4], 1
    %16 = vsyncpa %s15, 0
    loop: start=0, step=1, limit=4
    $region2: #{tpu_custom_call.1} parent=1 // loop_pre_header
      _
    $region3: #{tpu_custom_call.1} parent=1 // loop_header
      %s18 = sphi 0, %s22
      %p19 = scmp.ge.s32.totalorder %s18, 4
      %s26 = sphi 0, %s26
      %s28 = sphi 0, %s26
      %s29 = sphi 0, %s28
      %s43 = sphi 0, %s29
      %s49 = sphi 0, %s51
      %s52 = sphi 0, %s49
      %s53 = sphi 0, %s52
      %s69 = sphi 0, %s53
      %s73 = sphi 0, %s73
      %s75 = sphi 0, %s73
      %s76 = sphi 0, %s75
      %s90 = sphi 0, %s76
      %s94 = sphi 0, %s94
      %s96 = sphi 0, %s94
      %s97 = sphi 0, %s96
      %s111 = sphi 0, %s97
      %s115 = sphi 0, %s115
      %s117 = sphi 0, %s115
      %s118 = sphi 0, %s117
      %s132 = sphi 0, %s118
      %s136 = sphi 0, %s136
      %s138 = sphi 0, %s136
      %s139 = sphi 0, %s138
      %s153 = sphi 0, %s139
      %s159 = sphi 0, %s161
      %s162 = sphi 0, %s159
      %s163 = sphi 0, %s162
      %s179 = sphi 0, %s163
    $region4: #{tpu_custom_call.1} parent=1 // loop_header_branch
      %21 = sbr.rel (%p19) target = $region8
    $region5: #{tpu_custom_call.1} parent=1 // loop_body
      %s23 = ssub.s32 %s18, 1
      %s24 = ssub.s32 %s18, 2
      %s25 = sadd.s32 %s18, 1
      %s27 = sadd.s32 %s26, 1
      %p30 = scmp.eq.s32.totalorder %s18, 1
      %p31 = scmp.ne.s32.totalorder %s26, %s28
      %p32 = scmp.eq.s32.totalorder %s18, 0
      %p33 = por %p31, %p32
      %p34 = scmp.ne.s32.totalorder %s26, %s28
      %p35 = scmp.eq.s32.totalorder %s23, 1
      %p36 = por %p34, %p35
      %p37 = scmp.ne.s32.totalorder %s28, %s29
      %p38 = scmp.eq.s32.totalorder %s23, 0
      %p39 = por %p37, %p38
      %p40 = scmp.ne.s32.totalorder %s28, %s29
      %p41 = scmp.eq.s32.totalorder %s24, 1
      %p42 = por %p40, %p41
      %p44 = scmp.ne.s32.totalorder %s29, %s43
      %p45 = scmp.eq.s32.totalorder %s24, 0
      %p46 = por %p44, %p45
      %s47 = ssub.s32 %s18, %s25
      %p48 = scmp.eq.s32.totalorder %s47, 0
      %s50 = sadd.s32 %s49, 1
      %s51 = scalar_select %p48, %s49, %s50
      %p54 = pneg %p48
      %p55 = scmp.eq.s32.totalorder %s18, 1
      %p56 = por %p54, %p55
      %p57 = scmp.ne.s32.totalorder %s49, %s52
      %p58 = scmp.eq.s32.totalorder %s18, 0
      %p59 = por %p57, %p58
      %p60 = scmp.ne.s32.totalorder %s49, %s52
      %p61 = scmp.eq.s32.totalorder %s23, 1
      %p62 = por %p60, %p61
      %p63 = scmp.ne.s32.totalorder %s52, %s53
      %p64 = scmp.eq.s32.totalorder %s23, 0
      %p65 = por %p63, %p64
      %p66 = scmp.ne.s32.totalorder %s52, %s53
      %p67 = scmp.eq.s32.totalorder %s24, 1
      %p68 = por %p66, %p67
      %p70 = scmp.ne.s32.totalorder %s53, %s69
      %p71 = scmp.eq.s32.totalorder %s24, 0
      %p72 = por %p70, %p71
      %s74 = sadd.s32 %s73, 1
      %p77 = scmp.eq.s32.totalorder %s18, 1
      %p78 = scmp.ne.s32.totalorder %s73, %s75
      %p79 = scmp.eq.s32.totalorder %s18, 0
      %p80 = por %p78, %p79
      %p81 = scmp.ne.s32.totalorder %s73, %s75
      %p82 = scmp.eq.s32.totalorder %s23, 1
      %p83 = por %p81, %p82
      %p84 = scmp.ne.s32.totalorder %s75, %s76
      %p85 = scmp.eq.s32.totalorder %s23, 0
      %p86 = por %p84, %p85
      %p87 = scmp.ne.s32.totalorder %s75, %s76
      %p88 = scmp.eq.s32.totalorder %s24, 1
      %p89 = por %p87, %p88
      %p91 = scmp.ne.s32.totalorder %s76, %s90
      %p92 = scmp.eq.s32.totalorder %s24, 0
      %p93 = por %p91, %p92
      %s95 = sadd.s32 %s94, 1
      %p98 = scmp.eq.s32.totalorder %s18, 1
      %p99 = scmp.ne.s32.totalorder %s94, %s96
      %p100 = scmp.eq.s32.totalorder %s18, 0
      %p101 = por %p99, %p100
      %p102 = scmp.ne.s32.totalorder %s94, %s96
      %p103 = scmp.eq.s32.totalorder %s23, 1
      %p104 = por %p102, %p103
      %p105 = scmp.ne.s32.totalorder %s96, %s97
      %p106 = scmp.eq.s32.totalorder %s23, 0
      %p107 = por %p105, %p106
      %p108 = scmp.ne.s32.totalorder %s96, %s97
      %p109 = scmp.eq.s32.totalorder %s24, 1
      %p110 = por %p108, %p109
      %p112 = scmp.ne.s32.totalorder %s97, %s111
      %p113 = scmp.eq.s32.totalorder %s24, 0
      %p114 = por %p112, %p113
      %s116 = sadd.s32 %s115, 1
      %p119 = scmp.eq.s32.totalorder %s18, 1
      %p120 = scmp.ne.s32.totalorder %s115, %s117
      %p121 = scmp.eq.s32.totalorder %s18, 0
      %p122 = por %p120, %p121
      %p123 = scmp.ne.s32.totalorder %s115, %s117
      %p124 = scmp.eq.s32.totalorder %s23, 1
      %p125 = por %p123, %p124
      %p126 = scmp.ne.s32.totalorder %s117, %s118
      %p127 = scmp.eq.s32.totalorder %s23, 0
      %p128 = por %p126, %p127
      %p129 = scmp.ne.s32.totalorder %s117, %s118
      %p130 = scmp.eq.s32.totalorder %s24, 1
      %p131 = por %p129, %p130
      %p133 = scmp.ne.s32.totalorder %s118, %s132
      %p134 = scmp.eq.s32.totalorder %s24, 0
      %p135 = por %p133, %p134
      %s137 = sadd.s32 %s136, 1
      %p140 = scmp.eq.s32.totalorder %s18, 1
      %p141 = scmp.ne.s32.totalorder %s136, %s138
      %p142 = scmp.eq.s32.totalorder %s18, 0
      %p143 = por %p141, %p142
      %p144 = scmp.ne.s32.totalorder %s136, %s138
      %p145 = scmp.eq.s32.totalorder %s23, 1
      %p146 = por %p144, %p145
      %p147 = scmp.ne.s32.totalorder %s138, %s139
      %p148 = scmp.eq.s32.totalorder %s23, 0
      %p149 = por %p147, %p148
      %p150 = scmp.ne.s32.totalorder %s138, %s139
      %p151 = scmp.eq.s32.totalorder %s24, 1
      %p152 = por %p150, %p151
      %p154 = scmp.ne.s32.totalorder %s139, %s153
      %p155 = scmp.eq.s32.totalorder %s24, 0
      %p156 = por %p154, %p155
      %s157 = ssub.s32 %s18, %s25
      %p158 = scmp.eq.s32.totalorder %s157, 0
      %s160 = sadd.s32 %s159, 1
      %s161 = scalar_select %p158, %s159, %s160
      %p164 = pneg %p158
      %p165 = scmp.eq.s32.totalorder %s18, 1
      %p166 = por %p164, %p165
      %p167 = scmp.ne.s32.totalorder %s159, %s162
      %p168 = scmp.eq.s32.totalorder %s18, 0
      %p169 = por %p167, %p168
      %p170 = scmp.ne.s32.totalorder %s159, %s162
      %p171 = scmp.eq.s32.totalorder %s23, 1
      %p172 = por %p170, %p171
      %p173 = scmp.ne.s32.totalorder %s162, %s163
      %p174 = scmp.eq.s32.totalorder %s23, 0
      %p175 = por %p173, %p174
      %p176 = scmp.ne.s32.totalorder %s162, %s163
      %p177 = scmp.eq.s32.totalorder %s24, 1
      %p178 = por %p176, %p177
      %p180 = scmp.ne.s32.totalorder %s163, %s179
      %p181 = scmp.eq.s32.totalorder %s24, 0
      %p182 = por %p180, %p181
      %p183 = scmp.le.s32.totalorder 1, %s18
      %p184 = scmp.lt.s32.totalorder %s18, 3
      %p185 = pnand %p183, %p184
      %p186 = pneg %p185
      // Predicated region
      $region9: #{tpu_custom_call.1} parent=5 // pred_check
        _
      $region10: #{tpu_custom_call.1} parent=5 // pred_check_branch
        %188 = sbr.rel (%p185) target = $region12
      $region11: #{tpu_custom_call.1} parent=5 // pred_region
        %s189 = ssub.s32 %s18, 1
        // Predicated region
        $region13: #{tpu_custom_call.1} parent=11 // pred_check
          %p190 = pneg %p39
        $region14: #{tpu_custom_call.1} parent=11 // pred_check_branch
          %192 = sbr.rel (%p190) target = $region16
        $region15: #{tpu_custom_call.1} parent=11 // pred_region
          _
        $region16: #{tpu_custom_call.1} parent=11 // pred_fallthru
          _
        // Predicated region
        $region17: #{tpu_custom_call.1} parent=11 // pred_check
          %p193 = pneg %p86
        $region18: #{tpu_custom_call.1} parent=11 // pred_check_branch
          %195 = sbr.rel (%p193) target = $region20
        $region19: #{tpu_custom_call.1} parent=11 // pred_region
          _
        $region20: #{tpu_custom_call.1} parent=11 // pred_fallthru
          _
        // Predicated region
        $region21: #{tpu_custom_call.1} parent=11 // pred_check
          %p196 = pneg %p107
        $region22: #{tpu_custom_call.1} parent=11 // pred_check_branch
          %198 = sbr.rel (%p196) target = $region24
        $region23: #{tpu_custom_call.1} parent=11 // pred_region
          _
        $region24: #{tpu_custom_call.1} parent=11 // pred_fallthru
          _
        // Predicated region
        $region25: #{tpu_custom_call.1} parent=11 // pred_check
          %p199 = pneg %p128
        $region26: #{tpu_custom_call.1} parent=11 // pred_check_branch
          %201 = sbr.rel (%p199) target = $region28
        $region27: #{tpu_custom_call.1} parent=11 // pred_region
          _
        $region28: #{tpu_custom_call.1} parent=11 // pred_fallthru
          _
        // Predicated region
        $region29: #{tpu_custom_call.1} parent=11 // pred_check
          %p202 = pneg %p149
        $region30: #{tpu_custom_call.1} parent=11 // pred_check_branch
          %204 = sbr.rel (%p202) target = $region32
        $region31: #{tpu_custom_call.1} parent=11 // pred_region
          _
        $region32: #{tpu_custom_call.1} parent=11 // pred_fallthru
          _
      $region12: #{tpu_custom_call.1} parent=5 // pred_fallthru
        _
      %p205 = scmp.lt.s32.totalorder %s18, 2
      // Predicated region
      $region33: #{tpu_custom_call.1} parent=5 // pred_check
        %p206 = pneg %p205
      $region34: #{tpu_custom_call.1} parent=5 // pred_check_branch
        %208 = sbr.rel (%p206) target = $region36
      $region35: #{tpu_custom_call.1} parent=5 // pred_region
        // Predicated region
        $region37: #{tpu_custom_call.1} parent=35 // pred_check
          %p209 = pneg %p59
        $region38: #{tpu_custom_call.1} parent=35 // pred_check_branch
          %211 = sbr.rel (%p209) target = $region40
        $region39: #{tpu_custom_call.1} parent=35 // pred_region
          %s212 = sand.u32 %s49, 1
          %s213 = scalar_lea.sflag [#allocation3], %s212
          %s214 = sand.u32 %s49, 1
          %s215 = smul.addr %s214, 8
          %s216 = scalar_lea.vmem [#allocation2], %s215
          %s218 = ssub.s32 128, 128
          %219 = vsyncadd %s213, %s218
          %s220 = smul.addr %s18, 64
          %s221 = scalar_lea.hbm %s1, %s220
          %s222 = sshll.u32 %s216, 4
          %s223 = int_to_ptr.vmem [resolvable:$true] %s222
          %228 = dma.hbm_to_vmem [thread:$0]  %s221, 128, %s223, %s213, 128, 64, 4
        $region40: #{tpu_custom_call.1} parent=35 // pred_fallthru
          _
      $region36: #{tpu_custom_call.1} parent=5 // pred_fallthru
        _
      %p229 = scmp.le.s32.totalorder 1, %s18
      %p230 = scmp.lt.s32.totalorder %s18, 3
      %p231 = pnand %p229, %p230
      %p232 = pneg %p231
      // Predicated region
      $region41: #{tpu_custom_call.1} parent=5 // pred_check
        _
      $region42: #{tpu_custom_call.1} parent=5 // pred_check_branch
        %234 = sbr.rel (%p231) target = $region44
      $region43: #{tpu_custom_call.1} parent=5 // pred_region
        %s235 = ssub.s32 %s18, 1
        %s236 = sand.u32 %s52, 1
        %s237 = scalar_lea.sflag [#allocation3], %s236
        %s238 = sand.u32 %s52, 1
        %s239 = smul.addr %s238, 8
        %s240 = scalar_lea.vmem [#allocation2], %s239
        // Predicated region
        $region45: #{tpu_custom_call.1} parent=43 // pred_check
          %p241 = pneg %p65
        $region46: #{tpu_custom_call.1} parent=43 // pred_check_branch
          %243 = sbr.rel (%p241) target = $region48
        $region47: #{tpu_custom_call.1} parent=43 // pred_region
          %244 = dma.done %s237, 128
        $region48: #{tpu_custom_call.1} parent=43 // pred_fallthru
          _
        %p245 = pneg %p39
        %p246 = pneg %p36
        %s247 = sand.u32 %s52, 1
        %s248 = scalar_lea.sflag [#allocation3], %s247
        %s249 = sand.u32 %s52, 1
        %s250 = smul.addr %s249, 8
        %s251 = scalar_lea.vmem [#allocation2], %s250
        %p252 = pneg %p65
        %p253 = pneg %p62
        %p254 = pneg %p86
        %p255 = pneg %p83
        %p256 = pneg %p107
        %p257 = pneg %p104
        %p258 = pneg %p128
        %p259 = pneg %p125
        %p260 = pneg %p149
        %p261 = pneg %p146
        %p262 = pneg %p175
        %p263 = pneg %p172
        %s264 = sand.u32 %s162, 1
        %s265 = scalar_lea.sflag [#allocation4], %s264
        %s266 = sand.u32 %s162, 1
        %s267 = smul.addr %s266, 8
        %s268 = scalar_lea.vmem [#allocation5], %s267
        %v270 = vld [vmem:[%s2] sm:$0xf]
        %v271 = vld [vmem:[%s2 + $0x4] sm:$0xf]
        %v272 = vld [vmem:[%s2 + $0x8] sm:$0xf]
        %v273 = vld [vmem:[%s2 + $0xc] sm:$0xf]
        %v274 = vld [vmem:[%s3] sm:$0xff]
        %v275 = vld [vmem:[%s3 + $0x8] sm:$0xff]
        %v276 = vld [vmem:[%s3 + $0x10] sm:$0xff]
        %v277 = vld [vmem:[%s3 + $0x18] sm:$0xff]
        %v278 = vld [vmem:[%s240] sm:$0xf]
        %v279 = vpack.c.bf16 %v278, %v278
        %281 = vset.pattern.permute.xlu0 0
        %282 = vperm.xlu0 %281, %v274
        %v283 = vpop.permute.xlu0 %282
        %286 = vset.pattern.permute.xlu0 0
        %287 = vperm.xlu0 %286, %v275
        %v288 = vpop.permute.xlu0 %287
        %291 = vset.pattern.permute.xlu0 0
        %292 = vperm.xlu0 %291, %v276
        %v293 = vpop.permute.xlu0 %292
        %296 = vset.pattern.permute.xlu0 0
        %297 = vperm.xlu0 %296, %v277
        %v298 = vpop.permute.xlu0 %297
        %v304 = vunpack.c.l.b16 %v270
        %v305 = vunpack.c.l.b16 %v271
        %v306 = vunpack.c.l.b16 %v272
        %v307 = vunpack.c.l.b16 %v273
        %v308 = vpack.c.b16 %v305, %v304
        %v309 = vpack.c.b16 %v307, %v306
        %vm310 = vcmask 31744
        %v312 = vsel %vm310, %v308, 0
        %v315 = vsel %vm310, %v309, 0
        %vm317 = vcmask 1041408
        %v319 = vsel %vm317, %v279, 0
        %321 = vmatprep.subr.bf16.mxu0 0
        %322 = vmatpush1.bf16.msra.mxu0 %v319
        %323 = vmatprep.subr.bf16.mxu0 0
        %324 = vmatpush1.bf16.msra.mxu0 0
        %325 = vmatprep.subr.bf16.mxu0 0
        %326 = vmatpush1.bf16.msra.mxu0 0
        %327 = vmatprep.subr.bf16.mxu0 0
        %328 = vmatpush1.bf16.msra.mxu0 0
        %329 = vmatprep.subr.bf16.mxu0 0
        %330 = vmatpush1.bf16.msra.mxu0 0
        %331 = vmatprep.subr.bf16.mxu0 0
        %332 = vmatpush1.bf16.msra.mxu0 0
        %333 = vmatprep.subr.bf16.mxu0 0
        %334 = vmatpush1.bf16.msra.mxu0 0
        %335 = vmatprep.subr.bf16.mxu0 0
        %336 = vmatpush1.bf16.msra.mxu0 0
        %337 = vmatprep.subr.bf16.mxu0 0
        %338 = vmatpush1.bf16.msra.mxu0 0
        %339 = vmatprep.subr.bf16.mxu0 0
        %340 = vmatpush1.bf16.msra.mxu0 0
        %341 = vmatprep.subr.bf16.mxu0 0
        %342 = vmatpush1.bf16.msra.mxu0 0
        %343 = vmatprep.subr.bf16.mxu0 0
        %344 = vmatpush1.bf16.msra.mxu0 0
        %345 = vmatprep.subr.bf16.mxu0 0
        %346 = vmatpush1.bf16.msra.mxu0 0
        %347 = vmatprep.subr.bf16.mxu0 0
        %348 = vmatpush1.bf16.msra.mxu0 0
        %349 = vmatprep.subr.bf16.mxu0 0
        %350 = vmatpush1.bf16.msra.mxu0 0
        %351 = vmatprep.subr.bf16.mxu0 0
        %352 = vmatpush1.bf16.msra.mxu0 0
        %353 = vmatprep.mubr.bf16.mxu0 0
        %354 = vmatmul.mubr.bf16.gmra.mrb[0].mxu0 %v312
        %v355 = vpop.f32.mrb[0].mxu0
        %v356 = vadd.f32 %v283, %v355
        %v357 = vpop.f32.mrb[0].mxu0
        %v358 = vpop.f32.mrb[0].mxu0
        %v359 = vadd.f32 %v288, %v358
        %v360 = vpop.f32.mrb[0].mxu0
        %361 = vmatprep.mubr.bf16.mxu0 0
        %362 = vmatmul.mubr.bf16.gmra.mrb[0].mxu0 %v315
        %v363 = vpop.f32.mrb[0].mxu0
        %v364 = vadd.f32 %v293, %v363
        %v365 = vpop.f32.mrb[0].mxu0
        %v366 = vpop.f32.mrb[0].mxu0
        %v367 = vadd.f32 %v298, %v366
        %v368 = vpop.f32.mrb[0].mxu0
        %369 = vdwg.mxu0
        %v370 = vmul.f32 %v356, %v356
        %v371 = vmul.f32 %v359, %v359
        %v372 = vmul.f32 %v364, %v364
        %v373 = vmul.f32 %v367, %v367
        %v374 = vmul.f32 %v370, 0.035677407
        %v375 = vmul.f32 %v371, 0.035677407
        %v376 = vmul.f32 %v372, 0.035677407
        %v377 = vmul.f32 %v373, 0.035677407
        %v378 = vadd.f32 %v374, 0.7978846
        %v379 = vadd.f32 %v375, 0.7978846
        %v380 = vadd.f32 %v376, 0.7978846
        %v381 = vadd.f32 %v377, 0.7978846
        %v382 = vmul.f32 %v356, %v378
        %v383 = vmul.f32 %v359, %v379
        %v384 = vmul.f32 %v364, %v380
        %v385 = vmul.f32 %v367, %v381
        %v386 = vtanh.pop %v382
        %v387 = vtanh.pop %v383
        %v388 = vtanh.pop %v384
        %v389 = vtanh.pop %v385
        %v390 = vmul.f32 %v386, 0.5
        %v391 = vmul.f32 %v387, 0.5
        %v392 = vmul.f32 %v388, 0.5
        %v393 = vmul.f32 %v389, 0.5
        %v394 = vadd.f32 %v390, 0.5
        %v395 = vadd.f32 %v391, 0.5
        %v396 = vadd.f32 %v392, 0.5
        %v397 = vadd.f32 %v393, 0.5
        %v398 = vmul.f32 %v356, %v394
        %v399 = vmul.f32 %v359, %v395
        %v400 = vmul.f32 %v364, %v396
        %v401 = vmul.f32 %v367, %v397
        %v402 = vld [vmem:[%s4] sm:$0x3]
        %v403 = vpack.c.bf16 %v399, %v398
        %v404 = vpack.c.bf16 %v401, %v400
        %v405 = vld [vmem:[%s5] sm:$0xf]
        %407 = vset.pattern.permute.xlu0 0
        %408 = vperm.xlu0 %407, %v405
        %v409 = vpop.permute.xlu0 %408
        %vm411 = vcmask 261120
        %v413 = vsel %vm411, %v402, 0
        %415 = vmatprep.subr.bf16.mxu0 0
        %416 = vmatpush1.bf16.msra.mxu0 %v403
        %417 = vmatprep.subr.bf16.mxu0 0
        %418 = vmatpush1.bf16.msra.mxu0 %v404
        %419 = vmatprep.subr.bf16.mxu0 0
        %420 = vmatpush1.bf16.msra.mxu0 0
        %421 = vmatprep.subr.bf16.mxu0 0
        %422 = vmatpush1.bf16.msra.mxu0 0
        %423 = vmatprep.subr.bf16.mxu0 0
        %424 = vmatpush1.bf16.msra.mxu0 0
        %425 = vmatprep.subr.bf16.mxu0 0
        %426 = vmatpush1.bf16.msra.mxu0 0
        %427 = vmatprep.subr.bf16.mxu0 0
        %428 = vmatpush1.bf16.msra.mxu0 0
        %429 = vmatprep.subr.bf16.mxu0 0
        %430 = vmatpush1.bf16.msra.mxu0 0
        %431 = vmatprep.subr.bf16.mxu0 0
        %432 = vmatpush1.bf16.msra.mxu0 0
        %433 = vmatprep.subr.bf16.mxu0 0
        %434 = vmatpush1.bf16.msra.mxu0 0
        %435 = vmatprep.subr.bf16.mxu0 0
        %436 = vmatpush1.bf16.msra.mxu0 0
        %437 = vmatprep.subr.bf16.mxu0 0
        %438 = vmatpush1.bf16.msra.mxu0 0
        %439 = vmatprep.subr.bf16.mxu0 0
        %440 = vmatpush1.bf16.msra.mxu0 0
        %441 = vmatprep.subr.bf16.mxu0 0
        %442 = vmatpush1.bf16.msra.mxu0 0
        %443 = vmatprep.subr.bf16.mxu0 0
        %444 = vmatpush1.bf16.msra.mxu0 0
        %445 = vmatprep.subr.bf16.mxu0 0
        %446 = vmatpush1.bf16.msra.mxu0 0
        %447 = vmatprep.mubr.bf16.mxu0 0
        %448 = vmatmul.mubr.bf16.gmra.mrb[0].mxu0 %v413
        %v449 = vpop.f32.mrb[0].mxu0
        %v450 = vadd.f32 %v409, %v449
        %v451 = vpop.f32.mrb[0].mxu0
        %v452 = vpop.f32.mrb[0].mxu0
        %v453 = vpop.f32.mrb[0].mxu0
        %454 = vdwg.mxu0
        %v455 = vmul.f32 %v278, 1.0101526
        %v456 = vsub.f32 %v455, %v450
        %v457 = vpack.c.bf16 %v456, %v456
        %v459 = vsel %vm317, %v457, 0
        %461 = vmatprep.subr.bf16.mxu0 0
        %462 = vmatpush1.bf16.msra.mxu0 %v459
        %463 = vmatprep.subr.bf16.mxu0 0
        %464 = vmatpush1.bf16.msra.mxu0 0
        %465 = vmatprep.subr.bf16.mxu0 0
        %466 = vmatpush1.bf16.msra.mxu0 0
        %467 = vmatprep.subr.bf16.mxu0 0
        %468 = vmatpush1.bf16.msra.mxu0 0
        %469 = vmatprep.subr.bf16.mxu0 0
        %470 = vmatpush1.bf16.msra.mxu0 0
        %471 = vmatprep.subr.bf16.mxu0 0
        %472 = vmatpush1.bf16.msra.mxu0 0
        %473 = vmatprep.subr.bf16.mxu0 0
        %474 = vmatpush1.bf16.msra.mxu0 0
        %475 = vmatprep.subr.bf16.mxu0 0
        %476 = vmatpush1.bf16.msra.mxu0 0
        %477 = vmatprep.subr.bf16.mxu0 0
        %478 = vmatpush1.bf16.msra.mxu0 0
        %479 = vmatprep.subr.bf16.mxu0 0
        %480 = vmatpush1.bf16.msra.mxu0 0
        %481 = vmatprep.subr.bf16.mxu0 0
        %482 = vmatpush1.bf16.msra.mxu0 0
        %483 = vmatprep.subr.bf16.mxu0 0
        %484 = vmatpush1.bf16.msra.mxu0 0
        %485 = vmatprep.subr.bf16.mxu0 0
        %486 = vmatpush1.bf16.msra.mxu0 0
        %487 = vmatprep.subr.bf16.mxu0 0
        %488 = vmatpush1.bf16.msra.mxu0 0
        %489 = vmatprep.subr.bf16.mxu0 0
        %490 = vmatpush1.bf16.msra.mxu0 0
        %491 = vmatprep.subr.bf16.mxu0 0
        %492 = vmatpush1.bf16.msra.mxu0 0
        %493 = vmatprep.mubr.bf16.mxu0 0
        %494 = vmatmul.mubr.bf16.gmra.mrb[0].mxu0 %v312
        %v495 = vpop.f32.mrb[0].mxu0
        %v496 = vadd.f32 %v283, %v495
        %v497 = vpop.f32.mrb[0].mxu0
        %v498 = vpop.f32.mrb[0].mxu0
        %v499 = vadd.f32 %v288, %v498
        %v500 = vpop.f32.mrb[0].mxu0
        %501 = vmatprep.mubr.bf16.mxu0 0
        %502 = vmatmul.mubr.bf16.gmra.mrb[0].mxu0 %v315
        %v503 = vpop.f32.mrb[0].mxu0
        %v504 = vadd.f32 %v293, %v503
        %v505 = vpop.f32.mrb[0].mxu0
        %v506 = vpop.f32.mrb[0].mxu0
        %v507 = vadd.f32 %v298, %v506
        %v508 = vpop.f32.mrb[0].mxu0
        %509 = vdwg.mxu0
        %v510 = vmul.f32 %v496, %v496
        %v511 = vmul.f32 %v499, %v499
        %v512 = vmul.f32 %v504, %v504
        %v513 = vmul.f32 %v507, %v507
        %v514 = vmul.f32 %v510, 0.035677407
        %v515 = vmul.f32 %v511, 0.035677407
        %v516 = vmul.f32 %v512, 0.035677407
        %v517 = vmul.f32 %v513, 0.035677407
        %v518 = vadd.f32 %v514, 0.7978846
        %v519 = vadd.f32 %v515, 0.7978846
        %v520 = vadd.f32 %v516, 0.7978846
        %v521 = vadd.f32 %v517, 0.7978846
        %v522 = vmul.f32 %v496, %v518
        %v523 = vmul.f32 %v499, %v519
        %v524 = vmul.f32 %v504, %v520
        %v525 = vmul.f32 %v507, %v521
        %v526 = vtanh.pop %v522
        %v527 = vtanh.pop %v523
        %v528 = vtanh.pop %v524
        %v529 = vtanh.pop %v525
        %v530 = vmul.f32 %v526, 0.5
        %v531 = vmul.f32 %v527, 0.5
        %v532 = vmul.f32 %v528, 0.5
        %v533 = vmul.f32 %v529, 0.5
        %v534 = vadd.f32 %v530, 0.5
        %v535 = vadd.f32 %v531, 0.5
        %v536 = vadd.f32 %v532, 0.5
        %v537 = vadd.f32 %v533, 0.5
        %v538 = vmul.f32 %v496, %v534
        %v539 = vmul.f32 %v499, %v535
        %v540 = vmul.f32 %v504, %v536
        %v541 = vmul.f32 %v507, %v537
        %s542 = scalar_lea.vmem %s4, 2
        %v543 = vld [vmem:[%s542] sm:$0x3]
        %v544 = vpack.c.bf16 %v539, %v538
        %v545 = vpack.c.bf16 %v541, %v540
        %s546 = scalar_lea.vmem %s5, 4
        %v547 = vld [vmem:[%s546] sm:$0xf]
        %549 = vset.pattern.permute.xlu0 0
        %550 = vperm.xlu0 %549, %v547
        %v551 = vpop.permute.xlu0 %550
        %v554 = vsel %vm411, %v543, 0
        %556 = vmatprep.subr.bf16.mxu0 0
        %557 = vmatpush1.bf16.msra.mxu0 %v544
        %558 = vmatprep.subr.bf16.mxu0 0
        %559 = vmatpush1.bf16.msra.mxu0 %v545
        %560 = vmatprep.subr.bf16.mxu0 0
        %561 = vmatpush1.bf16.msra.mxu0 0
        %562 = vmatprep.subr.bf16.mxu0 0
        %563 = vmatpush1.bf16.msra.mxu0 0
        %564 = vmatprep.subr.bf16.mxu0 0
        %565 = vmatpush1.bf16.msra.mxu0 0
        %566 = vmatprep.subr.bf16.mxu0 0
        %567 = vmatpush1.bf16.msra.mxu0 0
        %568 = vmatprep.subr.bf16.mxu0 0
        %569 = vmatpush1.bf16.msra.mxu0 0
        %570 = vmatprep.subr.bf16.mxu0 0
        %571 = vmatpush1.bf16.msra.mxu0 0
        %572 = vmatprep.subr.bf16.mxu0 0
        %573 = vmatpush1.bf16.msra.mxu0 0
        %574 = vmatprep.subr.bf16.mxu0 0
        %575 = vmatpush1.bf16.msra.mxu0 0
        %576 = vmatprep.subr.bf16.mxu0 0
        %577 = vmatpush1.bf16.msra.mxu0 0
        %578 = vmatprep.subr.bf16.mxu0 0
        %579 = vmatpush1.bf16.msra.mxu0 0
        %580 = vmatprep.subr.bf16.mxu0 0
        %581 = vmatpush1.bf16.msra.mxu0 0
        %582 = vmatprep.subr.bf16.mxu0 0
        %583 = vmatpush1.bf16.msra.mxu0 0
        %584 = vmatprep.subr.bf16.mxu0 0
        %585 = vmatpush1.bf16.msra.mxu0 0
        %586 = vmatprep.subr.bf16.mxu0 0
        %587 = vmatpush1.bf16.msra.mxu0 0
        %588 = vmatprep.mubr.bf16.mxu0 0
        %589 = vmatmul.mubr.bf16.gmra.mrb[0].mxu0 %v554
        %v590 = vpop.f32.mrb[0].mxu0
        %v591 = vadd.f32 %v551, %v590
        %v592 = vpop.f32.mrb[0].mxu0
        %v593 = vpop.f32.mrb[0].mxu0
        %v594 = vpop.f32.mrb[0].mxu0
        %595 = vdwg.mxu0
        %v596 = vmul.f32 %v456, 1.0067511
        %v597 = vsub.f32 %v596, %v591
        %v598 = vpack.c.bf16 %v597, %v597
        %v600 = vsel %vm317, %v598, 0
        %602 = vmatprep.subr.bf16.mxu0 0
        %603 = vmatpush1.bf16.msra.mxu0 %v600
        %604 = vmatprep.subr.bf16.mxu0 0
        %605 = vmatpush1.bf16.msra.mxu0 0
        %606 = vmatprep.subr.bf16.mxu0 0
        %607 = vmatpush1.bf16.msra.mxu0 0
        %608 = vmatprep.subr.bf16.mxu0 0
        %609 = vmatpush1.bf16.msra.mxu0 0
        %610 = vmatprep.subr.bf16.mxu0 0
        %611 = vmatpush1.bf16.msra.mxu0 0
        %612 = vmatprep.subr.bf16.mxu0 0
        %613 = vmatpush1.bf16.msra.mxu0 0
        %614 = vmatprep.subr.bf16.mxu0 0
        %615 = vmatpush1.bf16.msra.mxu0 0
        %616 = vmatprep.subr.bf16.mxu0 0
        %617 = vmatpush1.bf16.msra.mxu0 0
        %618 = vmatprep.subr.bf16.mxu0 0
        %619 = vmatpush1.bf16.msra.mxu0 0
        %620 = vmatprep.subr.bf16.mxu0 0
        %621 = vmatpush1.bf16.msra.mxu0 0
        %622 = vmatprep.subr.bf16.mxu0 0
        %623 = vmatpush1.bf16.msra.mxu0 0
        %624 = vmatprep.subr.bf16.mxu0 0
        %625 = vmatpush1.bf16.msra.mxu0 0
        %626 = vmatprep.subr.bf16.mxu0 0
        %627 = vmatpush1.bf16.msra.mxu0 0
        %628 = vmatprep.subr.bf16.mxu0 0
        %629 = vmatpush1.bf16.msra.mxu0 0
        %630 = vmatprep.subr.bf16.mxu0 0
        %631 = vmatpush1.bf16.msra.mxu0 0
        %632 = vmatprep.subr.bf16.mxu0 0
        %633 = vmatpush1.bf16.msra.mxu0 0
        %634 = vmatprep.mubr.bf16.mxu0 0
        %635 = vmatmul.mubr.bf16.gmra.mrb[0].mxu0 %v312
        %v636 = vpop.f32.mrb[0].mxu0
        %v637 = vadd.f32 %v283, %v636
        %v638 = vpop.f32.mrb[0].mxu0
        %v639 = vpop.f32.mrb[0].mxu0
        %v640 = vadd.f32 %v288, %v639
        %v641 = vpop.f32.mrb[0].mxu0
        %642 = vmatprep.mubr.bf16.mxu0 0
        %643 = vmatmul.mubr.bf16.gmra.mrb[0].mxu0 %v315
        %v644 = vpop.f32.mrb[0].mxu0
        %v645 = vadd.f32 %v293, %v644
        %v646 = vpop.f32.mrb[0].mxu0
        %v647 = vpop.f32.mrb[0].mxu0
        %v648 = vadd.f32 %v298, %v647
        %v649 = vpop.f32.mrb[0].mxu0
        %650 = vdwg.mxu0
        %v651 = vmul.f32 %v637, %v637
        %v652 = vmul.f32 %v640, %v640
        %v653 = vmul.f32 %v645, %v645
        %v654 = vmul.f32 %v648, %v648
        %v655 = vmul.f32 %v651, 0.035677407
        %v656 = vmul.f32 %v652, 0.035677407
        %v657 = vmul.f32 %v653, 0.035677407
        %v658 = vmul.f32 %v654, 0.035677407
        %v659 = vadd.f32 %v655, 0.7978846
        %v660 = vadd.f32 %v656, 0.7978846
        %v661 = vadd.f32 %v657, 0.7978846
        %v662 = vadd.f32 %v658, 0.7978846
        %v663 = vmul.f32 %v637, %v659
        %v664 = vmul.f32 %v640, %v660
        %v665 = vmul.f32 %v645, %v661
        %v666 = vmul.f32 %v648, %v662
        %v667 = vtanh.pop %v663
        %v668 = vtanh.pop %v664
        %v669 = vtanh.pop %v665
        %v670 = vtanh.pop %v666
        %v671 = vmul.f32 %v667, 0.5
        %v672 = vmul.f32 %v668, 0.5
        %v673 = vmul.f32 %v669, 0.5
        %v674 = vmul.f32 %v670, 0.5
        %v675 = vadd.f32 %v671, 0.5
        %v676 = vadd.f32 %v672, 0.5
        %v677 = vadd.f32 %v673, 0.5
        %v678 = vadd.f32 %v674, 0.5
        %v679 = vmul.f32 %v637, %v675
        %v680 = vmul.f32 %v640, %v676
        %v681 = vmul.f32 %v645, %v677
        %v682 = vmul.f32 %v648, %v678
        %s683 = scalar_lea.vmem %s4, 4
        %v684 = vld [vmem:[%s683] sm:$0x3]
        %v685 = vpack.c.bf16 %v680, %v679
        %v686 = vpack.c.bf16 %v682, %v681
        %s687 = scalar_lea.vmem %s5, 8
        %v688 = vld [vmem:[%s687] sm:$0xf]
        %690 = vset.pattern.permute.xlu0 0
        %691 = vperm.xlu0 %690, %v688
        %v692 = vpop.permute.xlu0 %691
        %v695 = vsel %vm411, %v684, 0
        %697 = vmatprep.subr.bf16.mxu0 0
        %698 = vmatpush1.bf16.msra.mxu0 %v685
        %699 = vmatprep.subr.bf16.mxu0 0
        %700 = vmatpush1.bf16.msra.mxu0 %v686
        %701 = vmatprep.subr.bf16.mxu0 0
        %702 = vmatpush1.bf16.msra.mxu0 0
        %703 = vmatprep.subr.bf16.mxu0 0
        %704 = vmatpush1.bf16.msra.mxu0 0
        %705 = vmatprep.subr.bf16.mxu0 0
        %706 = vmatpush1.bf16.msra.mxu0 0
        %707 = vmatprep.subr.bf16.mxu0 0
        %708 = vmatpush1.bf16.msra.mxu0 0
        %709 = vmatprep.subr.bf16.mxu0 0
        %710 = vmatpush1.bf16.msra.mxu0 0
        %711 = vmatprep.subr.bf16.mxu0 0
        %712 = vmatpush1.bf16.msra.mxu0 0
        %713 = vmatprep.subr.bf16.mxu0 0
        %714 = vmatpush1.bf16.msra.mxu0 0
        %715 = vmatprep.subr.bf16.mxu0 0
        %716 = vmatpush1.bf16.msra.mxu0 0
        %717 = vmatprep.subr.bf16.mxu0 0
        %718 = vmatpush1.bf16.msra.mxu0 0
        %719 = vmatprep.subr.bf16.mxu0 0
        %720 = vmatpush1.bf16.msra.mxu0 0
        %721 = vmatprep.subr.bf16.mxu0 0
        %722 = vmatpush1.bf16.msra.mxu0 0
        %723 = vmatprep.subr.bf16.mxu0 0
        %724 = vmatpush1.bf16.msra.mxu0 0
        %725 = vmatprep.subr.bf16.mxu0 0
        %726 = vmatpush1.bf16.msra.mxu0 0
        %727 = vmatprep.subr.bf16.mxu0 0
        %728 = vmatpush1.bf16.msra.mxu0 0
        %729 = vmatprep.mubr.bf16.mxu0 0
        %730 = vmatmul.mubr.bf16.gmra.mrb[0].mxu0 %v695
        %v731 = vpop.f32.mrb[0].mxu0
        %v732 = vadd.f32 %v692, %v731
        %v733 = vpop.f32.mrb[0].mxu0
        %v734 = vpop.f32.mrb[0].mxu0
        %v735 = vpop.f32.mrb[0].mxu0
        %736 = vdwg.mxu0
        %v737 = vmul.f32 %v597, 1.0033838
        %v738 = vsub.f32 %v737, %v732
        %v739 = vpack.c.bf16 %v738, %v738
        %v741 = vsel %vm317, %v739, 0
        %743 = vmatprep.subr.bf16.mxu0 0
        %744 = vmatpush1.bf16.msra.mxu0 %v741
        %745 = vmatprep.subr.bf16.mxu0 0
        %746 = vmatpush1.bf16.msra.mxu0 0
        %747 = vmatprep.subr.bf16.mxu0 0
        %748 = vmatpush1.bf16.msra.mxu0 0
        %749 = vmatprep.subr.bf16.mxu0 0
        %750 = vmatpush1.bf16.msra.mxu0 0
        %751 = vmatprep.subr.bf16.mxu0 0
        %752 = vmatpush1.bf16.msra.mxu0 0
        %753 = vmatprep.subr.bf16.mxu0 0
        %754 = vmatpush1.bf16.msra.mxu0 0
        %755 = vmatprep.subr.bf16.mxu0 0
        %756 = vmatpush1.bf16.msra.mxu0 0
        %757 = vmatprep.subr.bf16.mxu0 0
        %758 = vmatpush1.bf16.msra.mxu0 0
        %759 = vmatprep.subr.bf16.mxu0 0
        %760 = vmatpush1.bf16.msra.mxu0 0
        %761 = vmatprep.subr.bf16.mxu0 0
        %762 = vmatpush1.bf16.msra.mxu0 0
        %763 = vmatprep.subr.bf16.mxu0 0
        %764 = vmatpush1.bf16.msra.mxu0 0
        %765 = vmatprep.subr.bf16.mxu0 0
        %766 = vmatpush1.bf16.msra.mxu0 0
        %767 = vmatprep.subr.bf16.mxu0 0
        %768 = vmatpush1.bf16.msra.mxu0 0
        %769 = vmatprep.subr.bf16.mxu0 0
        %770 = vmatpush1.bf16.msra.mxu0 0
        %771 = vmatprep.subr.bf16.mxu0 0
        %772 = vmatpush1.bf16.msra.mxu0 0
        %773 = vmatprep.subr.bf16.mxu0 0
        %774 = vmatpush1.bf16.msra.mxu0 0
        %775 = vmatprep.mubr.bf16.mxu0 0
        %776 = vmatmul.mubr.bf16.gmra.mrb[0].mxu0 %v312
        %v777 = vpop.f32.mrb[0].mxu0
        %v778 = vadd.f32 %v283, %v777
        %v779 = vpop.f32.mrb[0].mxu0
        %v780 = vpop.f32.mrb[0].mxu0
        %v781 = vadd.f32 %v288, %v780
        %v782 = vpop.f32.mrb[0].mxu0
        %783 = vmatprep.mubr.bf16.mxu0 0
        %784 = vmatmul.mubr.bf16.gmra.mrb[0].mxu0 %v315
        %v785 = vpop.f32.mrb[0].mxu0
        %v786 = vadd.f32 %v293, %v785
        %v787 = vpop.f32.mrb[0].mxu0
        %v788 = vpop.f32.mrb[0].mxu0
        %v789 = vadd.f32 %v298, %v788
        %v790 = vpop.f32.mrb[0].mxu0
        %791 = vdwg.mxu0
        %v792 = vmul.f32 %v778, %v778
        %v793 = vmul.f32 %v781, %v781
        %v794 = vmul.f32 %v786, %v786
        %v795 = vmul.f32 %v789, %v789
        %v796 = vmul.f32 %v792, 0.035677407
        %v797 = vmul.f32 %v793, 0.035677407
        %v798 = vmul.f32 %v794, 0.035677407
        %v799 = vmul.f32 %v795, 0.035677407
        %v800 = vadd.f32 %v796, 0.7978846
        %v801 = vadd.f32 %v797, 0.7978846
        %v802 = vadd.f32 %v798, 0.7978846
        %v803 = vadd.f32 %v799, 0.7978846
        %v804 = vmul.f32 %v778, %v800
        %v805 = vmul.f32 %v781, %v801
        %v806 = vmul.f32 %v786, %v802
        %v807 = vmul.f32 %v789, %v803
        %v808 = vtanh.pop %v804
        %v809 = vtanh.pop %v805
        %v810 = vtanh.pop %v806
        %v811 = vtanh.pop %v807
        %v812 = vmul.f32 %v808, 0.5
        %v813 = vmul.f32 %v809, 0.5
        %v814 = vmul.f32 %v810, 0.5
        %v815 = vmul.f32 %v811, 0.5
        %v816 = vadd.f32 %v812, 0.5
        %v817 = vadd.f32 %v813, 0.5
        %v818 = vadd.f32 %v814, 0.5
        %v819 = vadd.f32 %v815, 0.5
        %v820 = vmul.f32 %v778, %v816
        %v821 = vmul.f32 %v781, %v817
        %v822 = vmul.f32 %v786, %v818
        %v823 = vmul.f32 %v789, %v819
        %s824 = scalar_lea.vmem %s4, 6
        %v825 = vld [vmem:[%s824] sm:$0x3]
        %v826 = vpack.c.bf16 %v821, %v820
        %v827 = vpack.c.bf16 %v823, %v822
        %s828 = scalar_lea.vmem %s5, 12
        %v829 = vld [vmem:[%s828] sm:$0xf]
        %831 = vset.pattern.permute.xlu0 0
        %832 = vperm.xlu0 %831, %v829
        %v833 = vpop.permute.xlu0 %832
        %v836 = vsel %vm411, %v825, 0
        %838 = vmatprep.subr.bf16.mxu0 0
        %839 = vmatpush1.bf16.msra.mxu0 %v826
        %840 = vmatprep.subr.bf16.mxu0 0
        %841 = vmatpush1.bf16.msra.mxu0 %v827
        %842 = vmatprep.subr.bf16.mxu0 0
        %843 = vmatpush1.bf16.msra.mxu0 0
        %844 = vmatprep.subr.bf16.mxu0 0
        %845 = vmatpush1.bf16.msra.mxu0 0
        %846 = vmatprep.subr.bf16.mxu0 0
        %847 = vmatpush1.bf16.msra.mxu0 0
        %848 = vmatprep.subr.bf16.mxu0 0
        %849 = vmatpush1.bf16.msra.mxu0 0
        %850 = vmatprep.subr.bf16.mxu0 0
        %851 = vmatpush1.bf16.msra.mxu0 0
        %852 = vmatprep.subr.bf16.mxu0 0
        %853 = vmatpush1.bf16.msra.mxu0 0
        %854 = vmatprep.subr.bf16.mxu0 0
        %855 = vmatpush1.bf16.msra.mxu0 0
        %856 = vmatprep.subr.bf16.mxu0 0
        %857 = vmatpush1.bf16.msra.mxu0 0
        %858 = vmatprep.subr.bf16.mxu0 0
        %859 = vmatpush1.bf16.msra.mxu0 0
        %860 = vmatprep.subr.bf16.mxu0 0
        %861 = vmatpush1.bf16.msra.mxu0 0
        %862 = vmatprep.subr.bf16.mxu0 0
        %863 = vmatpush1.bf16.msra.mxu0 0
        %864 = vmatprep.subr.bf16.mxu0 0
        %865 = vmatpush1.bf16.msra.mxu0 0
        %866 = vmatprep.subr.bf16.mxu0 0
        %867 = vmatpush1.bf16.msra.mxu0 0
        %868 = vmatprep.subr.bf16.mxu0 0
        %869 = vmatpush1.bf16.msra.mxu0 0
        %870 = vmatprep.mubr.bf16.mxu0 0
        %871 = vmatmul.mubr.bf16.gmra.mrb[0].mxu0 %v836
        %v872 = vpop.f32.mrb[0].mxu0
        %v873 = vadd.f32 %v833, %v872
        %v874 = vpop.f32.mrb[0].mxu0
        %v875 = vpop.f32.mrb[0].mxu0
        %v876 = vpop.f32.mrb[0].mxu0
        %877 = vdwg.mxu0
        %v878 = vmul.f32 %v738, 1.00005
        %v879 = vsub.f32 %v878, %v873
        %880 = vst [vmem:[%s268] sm:$0xf] %v879
        %s881 = scalar_lea.vmem %s240, 4 [#allocation2]
        %v882 = vld [vmem:[%s881] sm:$0xf]
        %v883 = vpack.c.bf16 %v882, %v882
        %v885 = vsel %vm317, %v883, 0
        %887 = vmatprep.subr.bf16.mxu0 0
        %888 = vmatpush1.bf16.msra.mxu0 %v885
        %889 = vmatprep.subr.bf16.mxu0 0
        %890 = vmatpush1.bf16.msra.mxu0 0
        %891 = vmatprep.subr.bf16.mxu0 0
        %892 = vmatpush1.bf16.msra.mxu0 0
        %893 = vmatprep.subr.bf16.mxu0 0
        %894 = vmatpush1.bf16.msra.mxu0 0
        %895 = vmatprep.subr.bf16.mxu0 0
        %896 = vmatpush1.bf16.msra.mxu0 0
        %897 = vmatprep.subr.bf16.mxu0 0
        %898 = vmatpush1.bf16.msra.mxu0 0
        %899 = vmatprep.subr.bf16.mxu0 0
        %900 = vmatpush1.bf16.msra.mxu0 0
        %901 = vmatprep.subr.bf16.mxu0 0
        %902 = vmatpush1.bf16.msra.mxu0 0
        %903 = vmatprep.subr.bf16.mxu0 0
        %904 = vmatpush1.bf16.msra.mxu0 0
        %905 = vmatprep.subr.bf16.mxu0 0
        %906 = vmatpush1.bf16.msra.mxu0 0
        %907 = vmatprep.subr.bf16.mxu0 0
        %908 = vmatpush1.bf16.msra.mxu0 0
        %909 = vmatprep.subr.bf16.mxu0 0
        %910 = vmatpush1.bf16.msra.mxu0 0
        %911 = vmatprep.subr.bf16.mxu0 0
        %912 = vmatpush1.bf16.msra.mxu0 0
        %913 = vmatprep.subr.bf16.mxu0 0
        %914 = vmatpush1.bf16.msra.mxu0 0
        %915 = vmatprep.subr.bf16.mxu0 0
        %916 = vmatpush1.bf16.msra.mxu0 0
        %917 = vmatprep.subr.bf16.mxu0 0
        %918 = vmatpush1.bf16.msra.mxu0 0
        %919 = vmatprep.mubr.bf16.mxu0 0
        %920 = vmatmul.mubr.bf16.gmra.mrb[0].mxu0 %v312
        %v921 = vpop.f32.mrb[0].mxu0
        %v922 = vadd.f32 %v283, %v921
        %v923 = vpop.f32.mrb[0].mxu0
        %v924 = vpop.f32.mrb[0].mxu0
        %v925 = vadd.f32 %v288, %v924
        %v926 = vpop.f32.mrb[0].mxu0
        %927 = vmatprep.mubr.bf16.mxu0 0
        %928 = vmatmul.mubr.bf16.gmra.mrb[0].mxu0 %v315
        %v929 = vpop.f32.mrb[0].mxu0
        %v930 = vadd.f32 %v293, %v929
        %v931 = vpop.f32.mrb[0].mxu0
        %v932 = vpop.f32.mrb[0].mxu0
        %v933 = vadd.f32 %v298, %v932
        %v934 = vpop.f32.mrb[0].mxu0
        %935 = vdwg.mxu0
        %v936 = vmul.f32 %v922, %v922
        %v937 = vmul.f32 %v925, %v925
        %v938 = vmul.f32 %v930, %v930
        %v939 = vmul.f32 %v933, %v933
        %v940 = vmul.f32 %v936, 0.035677407
        %v941 = vmul.f32 %v937, 0.035677407
        %v942 = vmul.f32 %v938, 0.035677407
        %v943 = vmul.f32 %v939, 0.035677407
        %v944 = vadd.f32 %v940, 0.7978846
        %v945 = vadd.f32 %v941, 0.7978846
        %v946 = vadd.f32 %v942, 0.7978846
        %v947 = vadd.f32 %v943, 0.7978846
        %v948 = vmul.f32 %v922, %v944
        %v949 = vmul.f32 %v925, %v945
        %v950 = vmul.f32 %v930, %v946
        %v951 = vmul.f32 %v933, %v947
        %v952 = vtanh.pop %v948
        %v953 = vtanh.pop %v949
        %v954 = vtanh.pop %v950
        %v955 = vtanh.pop %v951
        %v956 = vmul.f32 %v952, 0.5
        %v957 = vmul.f32 %v953, 0.5
        %v958 = vmul.f32 %v954, 0.5
        %v959 = vmul.f32 %v955, 0.5
        %v960 = vadd.f32 %v956, 0.5
        %v961 = vadd.f32 %v957, 0.5
        %v962 = vadd.f32 %v958, 0.5
        %v963 = vadd.f32 %v959, 0.5
        %v964 = vmul.f32 %v922, %v960
        %v965 = vmul.f32 %v925, %v961
        %v966 = vmul.f32 %v930, %v962
        %v967 = vmul.f32 %v933, %v963
        %v968 = vld [vmem:[%s4] sm:$0x3]
        %v969 = vpack.c.bf16 %v965, %v964
        %v970 = vpack.c.bf16 %v967, %v966
        %v971 = vld [vmem:[%s5] sm:$0xf]
        %973 = vset.pattern.permute.xlu0 0
        %974 = vperm.xlu0 %973, %v971
        %v975 = vpop.permute.xlu0 %974
        %v978 = vsel %vm411, %v968, 0
        %980 = vmatprep.subr.bf16.mxu0 0
        %981 = vmatpush1.bf16.msra.mxu0 %v969
        %982 = vmatprep.subr.bf16.mxu0 0
        %983 = vmatpush1.bf16.msra.mxu0 %v970
        %984 = vmatprep.subr.bf16.mxu0 0
        %985 = vmatpush1.bf16.msra.mxu0 0
        %986 = vmatprep.subr.bf16.mxu0 0
        %987 = vmatpush1.bf16.msra.mxu0 0
        %988 = vmatprep.subr.bf16.mxu0 0
        %989 = vmatpush1.bf16.msra.mxu0 0
        %990 = vmatprep.subr.bf16.mxu0 0
        %991 = vmatpush1.bf16.msra.mxu0 0
        %992 = vmatprep.subr.bf16.mxu0 0
        %993 = vmatpush1.bf16.msra.mxu0 0
        %994 = vmatprep.subr.bf16.mxu0 0
        %995 = vmatpush1.bf16.msra.mxu0 0
        %996 = vmatprep.subr.bf16.mxu0 0
        %997 = vmatpush1.bf16.msra.mxu0 0
        %998 = vmatprep.subr.bf16.mxu0 0
        %999 = vmatpush1.bf16.msra.mxu0 0
        %1000 = vmatprep.subr.bf16.mxu0 0
        %1001 = vmatpush1.bf16.msra.mxu0 0
        %1002 = vmatprep.subr.bf16.mxu0 0
        %1003 = vmatpush1.bf16.msra.mxu0 0
        %1004 = vmatprep.subr.bf16.mxu0 0
        %1005 = vmatpush1.bf16.msra.mxu0 0
        %1006 = vmatprep.subr.bf16.mxu0 0
        %1007 = vmatpush1.bf16.msra.mxu0 0
        %1008 = vmatprep.subr.bf16.mxu0 0
        %1009 = vmatpush1.bf16.msra.mxu0 0
        %1010 = vmatprep.subr.bf16.mxu0 0
        %1011 = vmatpush1.bf16.msra.mxu0 0
        %1012 = vmatprep.mubr.bf16.mxu0 0
        %1013 = vmatmul.mubr.bf16.gmra.mrb[0].mxu0 %v978
        %v1014 = vpop.f32.mrb[0].mxu0
        %v1015 = vadd.f32 %v975, %v1014
        %v1016 = vpop.f32.mrb[0].mxu0
        %v1017 = vpop.f32.mrb[0].mxu0
        %v1018 = vpop.f32.mrb[0].mxu0
        %1019 = vdwg.mxu0
        %v1020 = vmul.f32 %v882, 1.0101526
        %v1021 = vsub.f32 %v1020, %v1015
        %v1022 = vpack.c.bf16 %v1021, %v1021
        %v1024 = vsel %vm317, %v1022, 0
        %1026 = vmatprep.subr.bf16.mxu0 0
        %1027 = vmatpush1.bf16.msra.mxu0 %v1024
        %1028 = vmatprep.subr.bf16.mxu0 0
        %1029 = vmatpush1.bf16.msra.mxu0 0
        %1030 = vmatprep.subr.bf16.mxu0 0
        %1031 = vmatpush1.bf16.msra.mxu0 0
        %1032 = vmatprep.subr.bf16.mxu0 0
        %1033 = vmatpush1.bf16.msra.mxu0 0
        %1034 = vmatprep.subr.bf16.mxu0 0
        %1035 = vmatpush1.bf16.msra.mxu0 0
        %1036 = vmatprep.subr.bf16.mxu0 0
        %1037 = vmatpush1.bf16.msra.mxu0 0
        %1038 = vmatprep.subr.bf16.mxu0 0
        %1039 = vmatpush1.bf16.msra.mxu0 0
        %1040 = vmatprep.subr.bf16.mxu0 0
        %1041 = vmatpush1.bf16.msra.mxu0 0
        %1042 = vmatprep.subr.bf16.mxu0 0
        %1043 = vmatpush1.bf16.msra.mxu0 0
        %1044 = vmatprep.subr.bf16.mxu0 0
        %1045 = vmatpush1.bf16.msra.mxu0 0
        %1046 = vmatprep.subr.bf16.mxu0 0
        %1047 = vmatpush1.bf16.msra.mxu0 0
        %1048 = vmatprep.subr.bf16.mxu0 0
        %1049 = vmatpush1.bf16.msra.mxu0 0
        %1050 = vmatprep.subr.bf16.mxu0 0
        %1051 = vmatpush1.bf16.msra.mxu0 0
        %1052 = vmatprep.subr.bf16.mxu0 0
        %1053 = vmatpush1.bf16.msra.mxu0 0
        %1054 = vmatprep.subr.bf16.mxu0 0
        %1055 = vmatpush1.bf16.msra.mxu0 0
        %1056 = vmatprep.subr.bf16.mxu0 0
        %1057 = vmatpush1.bf16.msra.mxu0 0
        %1058 = vmatprep.mubr.bf16.mxu0 0
        %1059 = vmatmul.mubr.bf16.gmra.mrb[0].mxu0 %v312
        %v1060 = vpop.f32.mrb[0].mxu0
        %v1061 = vadd.f32 %v283, %v1060
        %v1062 = vpop.f32.mrb[0].mxu0
        %v1063 = vpop.f32.mrb[0].mxu0
        %v1064 = vadd.f32 %v288, %v1063
        %v1065 = vpop.f32.mrb[0].mxu0
        %1066 = vmatprep.mubr.bf16.mxu0 0
        %1067 = vmatmul.mubr.bf16.gmra.mrb[0].mxu0 %v315
        %v1068 = vpop.f32.mrb[0].mxu0
        %v1069 = vadd.f32 %v293, %v1068
        %v1070 = vpop.f32.mrb[0].mxu0
        %v1071 = vpop.f32.mrb[0].mxu0
        %v1072 = vadd.f32 %v298, %v1071
        %v1073 = vpop.f32.mrb[0].mxu0
        %1074 = vdwg.mxu0
        %v1075 = vmul.f32 %v1061, %v1061
        %v1076 = vmul.f32 %v1064, %v1064
        %v1077 = vmul.f32 %v1069, %v1069
        %v1078 = vmul.f32 %v1072, %v1072
        %v1079 = vmul.f32 %v1075, 0.035677407
        %v1080 = vmul.f32 %v1076, 0.035677407
        %v1081 = vmul.f32 %v1077, 0.035677407
        %v1082 = vmul.f32 %v1078, 0.035677407
        %v1083 = vadd.f32 %v1079, 0.7978846
        %v1084 = vadd.f32 %v1080, 0.7978846
        %v1085 = vadd.f32 %v1081, 0.7978846
        %v1086 = vadd.f32 %v1082, 0.7978846
        %v1087 = vmul.f32 %v1061, %v1083
        %v1088 = vmul.f32 %v1064, %v1084
        %v1089 = vmul.f32 %v1069, %v1085
        %v1090 = vmul.f32 %v1072, %v1086
        %v1091 = vtanh.pop %v1087
        %v1092 = vtanh.pop %v1088
        %v1093 = vtanh.pop %v1089
        %v1094 = vtanh.pop %v1090
        %v1095 = vmul.f32 %v1091, 0.5
        %v1096 = vmul.f32 %v1092, 0.5
        %v1097 = vmul.f32 %v1093, 0.5
        %v1098 = vmul.f32 %v1094, 0.5
        %v1099 = vadd.f32 %v1095, 0.5
        %v1100 = vadd.f32 %v1096, 0.5
        %v1101 = vadd.f32 %v1097, 0.5
        %v1102 = vadd.f32 %v1098, 0.5
        %v1103 = vmul.f32 %v1061, %v1099
        %v1104 = vmul.f32 %v1064, %v1100
        %v1105 = vmul.f32 %v1069, %v1101
        %v1106 = vmul.f32 %v1072, %v1102
        %v1107 = vld [vmem:[%s542] sm:$0x3]
        %v1108 = vpack.c.bf16 %v1104, %v1103
        %v1109 = vpack.c.bf16 %v1106, %v1105
        %v1110 = vld [vmem:[%s546] sm:$0xf]
        %1112 = vset.pattern.permute.xlu0 0
        %1113 = vperm.xlu0 %1112, %v1110
        %v1114 = vpop.permute.xlu0 %1113
        %v1117 = vsel %vm411, %v1107, 0
        %1119 = vmatprep.subr.bf16.mxu0 0
        %1120 = vmatpush1.bf16.msra.mxu0 %v1108
        %1121 = vmatprep.subr.bf16.mxu0 0
        %1122 = vmatpush1.bf16.msra.mxu0 %v1109
        %1123 = vmatprep.subr.bf16.mxu0 0
        %1124 = vmatpush1.bf16.msra.mxu0 0
        %1125 = vmatprep.subr.bf16.mxu0 0
        %1126 = vmatpush1.bf16.msra.mxu0 0
        %1127 = vmatprep.subr.bf16.mxu0 0
        %1128 = vmatpush1.bf16.msra.mxu0 0
        %1129 = vmatprep.subr.bf16.mxu0 0
        %1130 = vmatpush1.bf16.msra.mxu0 0
        %1131 = vmatprep.subr.bf16.mxu0 0
        %1132 = vmatpush1.bf16.msra.mxu0 0
        %1133 = vmatprep.subr.bf16.mxu0 0
        %1134 = vmatpush1.bf16.msra.mxu0 0
        %1135 = vmatprep.subr.bf16.mxu0 0
        %1136 = vmatpush1.bf16.msra.mxu0 0
        %1137 = vmatprep.subr.bf16.mxu0 0
        %1138 = vmatpush1.bf16.msra.mxu0 0
        %1139 = vmatprep.subr.bf16.mxu0 0
        %1140 = vmatpush1.bf16.msra.mxu0 0
        %1141 = vmatprep.subr.bf16.mxu0 0
        %1142 = vmatpush1.bf16.msra.mxu0 0
        %1143 = vmatprep.subr.bf16.mxu0 0
        %1144 = vmatpush1.bf16.msra.mxu0 0
        %1145 = vmatprep.subr.bf16.mxu0 0
        %1146 = vmatpush1.bf16.msra.mxu0 0
        %1147 = vmatprep.subr.bf16.mxu0 0
        %1148 = vmatpush1.bf16.msra.mxu0 0
        %1149 = vmatprep.subr.bf16.mxu0 0
        %1150 = vmatpush1.bf16.msra.mxu0 0
        %1151 = vmatprep.mubr.bf16.mxu0 0
        %1152 = vmatmul.mubr.bf16.gmra.mrb[0].mxu0 %v1117
        %v1153 = vpop.f32.mrb[0].mxu0
        %v1154 = vadd.f32 %v1114, %v1153
        %v1155 = vpop.f32.mrb[0].mxu0
        %v1156 = vpop.f32.mrb[0].mxu0
        %v1157 = vpop.f32.mrb[0].mxu0
        %1158 = vdwg.mxu0
        %v1159 = vmul.f32 %v1021, 1.0067511
        %v1160 = vsub.f32 %v1159, %v1154
        %v1161 = vpack.c.bf16 %v1160, %v1160
        %v1163 = vsel %vm317, %v1161, 0
        %1165 = vmatprep.subr.bf16.mxu0 0
        %1166 = vmatpush1.bf16.msra.mxu0 %v1163
        %1167 = vmatprep.subr.bf16.mxu0 0
        %1168 = vmatpush1.bf16.msra.mxu0 0
        %1169 = vmatprep.subr.bf16.mxu0 0
        %1170 = vmatpush1.bf16.msra.mxu0 0
        %1171 = vmatprep.subr.bf16.mxu0 0
        %1172 = vmatpush1.bf16.msra.mxu0 0
        %1173 = vmatprep.subr.bf16.mxu0 0
        %1174 = vmatpush1.bf16.msra.mxu0 0
        %1175 = vmatprep.subr.bf16.mxu0 0
        %1176 = vmatpush1.bf16.msra.mxu0 0
        %1177 = vmatprep.subr.bf16.mxu0 0
        %1178 = vmatpush1.bf16.msra.mxu0 0
        %1179 = vmatprep.subr.bf16.mxu0 0
        %1180 = vmatpush1.bf16.msra.mxu0 0
        %1181 = vmatprep.subr.bf16.mxu0 0
        %1182 = vmatpush1.bf16.msra.mxu0 0
        %1183 = vmatprep.subr.bf16.mxu0 0
        %1184 = vmatpush1.bf16.msra.mxu0 0
        %1185 = vmatprep.subr.bf16.mxu0 0
        %1186 = vmatpush1.bf16.msra.mxu0 0
        %1187 = vmatprep.subr.bf16.mxu0 0
        %1188 = vmatpush1.bf16.msra.mxu0 0
        %1189 = vmatprep.subr.bf16.mxu0 0
        %1190 = vmatpush1.bf16.msra.mxu0 0
        %1191 = vmatprep.subr.bf16.mxu0 0
        %1192 = vmatpush1.bf16.msra.mxu0 0
        %1193 = vmatprep.subr.bf16.mxu0 0
        %1194 = vmatpush1.bf16.msra.mxu0 0
        %1195 = vmatprep.subr.bf16.mxu0 0
        %1196 = vmatpush1.bf16.msra.mxu0 0
        %1197 = vmatprep.mubr.bf16.mxu0 0
        %1198 = vmatmul.mubr.bf16.gmra.mrb[0].mxu0 %v312
        %v1199 = vpop.f32.mrb[0].mxu0
        %v1200 = vadd.f32 %v283, %v1199
        %v1201 = vpop.f32.mrb[0].mxu0
        %v1202 = vpop.f32.mrb[0].mxu0
        %v1203 = vadd.f32 %v288, %v1202
        %v1204 = vpop.f32.mrb[0].mxu0
        %1205 = vmatprep.mubr.bf16.mxu0 0
        %1206 = vmatmul.mubr.bf16.gmra.mrb[0].mxu0 %v315
        %v1207 = vpop.f32.mrb[0].mxu0
        %v1208 = vadd.f32 %v293, %v1207
        %v1209 = vpop.f32.mrb[0].mxu0
        %v1210 = vpop.f32.mrb[0].mxu0
        %v1211 = vadd.f32 %v298, %v1210
        %v1212 = vpop.f32.mrb[0].mxu0
        %1213 = vdwg.mxu0
        %v1214 = vmul.f32 %v1200, %v1200
        %v1215 = vmul.f32 %v1203, %v1203
        %v1216 = vmul.f32 %v1208, %v1208
        %v1217 = vmul.f32 %v1211, %v1211
        %v1218 = vmul.f32 %v1214, 0.035677407
        %v1219 = vmul.f32 %v1215, 0.035677407
        %v1220 = vmul.f32 %v1216, 0.035677407
        %v1221 = vmul.f32 %v1217, 0.035677407
        %v1222 = vadd.f32 %v1218, 0.7978846
        %v1223 = vadd.f32 %v1219, 0.7978846
        %v1224 = vadd.f32 %v1220, 0.7978846
        %v1225 = vadd.f32 %v1221, 0.7978846
        %v1226 = vmul.f32 %v1200, %v1222
        %v1227 = vmul.f32 %v1203, %v1223
        %v1228 = vmul.f32 %v1208, %v1224
        %v1229 = vmul.f32 %v1211, %v1225
        %v1230 = vtanh.pop %v1226
        %v1231 = vtanh.pop %v1227
        %v1232 = vtanh.pop %v1228
        %v1233 = vtanh.pop %v1229
        %v1234 = vmul.f32 %v1230, 0.5
        %v1235 = vmul.f32 %v1231, 0.5
        %v1236 = vmul.f32 %v1232, 0.5
        %v1237 = vmul.f32 %v1233, 0.5
        %v1238 = vadd.f32 %v1234, 0.5
        %v1239 = vadd.f32 %v1235, 0.5
        %v1240 = vadd.f32 %v1236, 0.5
        %v1241 = vadd.f32 %v1237, 0.5
        %v1242 = vmul.f32 %v1200, %v1238
        %v1243 = vmul.f32 %v1203, %v1239
        %v1244 = vmul.f32 %v1208, %v1240
        %v1245 = vmul.f32 %v1211, %v1241
        %v1246 = vld [vmem:[%s683] sm:$0x3]
        %v1247 = vpack.c.bf16 %v1243, %v1242
        %v1248 = vpack.c.bf16 %v1245, %v1244
        %v1249 = vld [vmem:[%s687] sm:$0xf]
        %1251 = vset.pattern.permute.xlu0 0
        %1252 = vperm.xlu0 %1251, %v1249
        %v1253 = vpop.permute.xlu0 %1252
        %v1256 = vsel %vm411, %v1246, 0
        %1258 = vmatprep.subr.bf16.mxu0 0
        %1259 = vmatpush1.bf16.msra.mxu0 %v1247
        %1260 = vmatprep.subr.bf16.mxu0 0
        %1261 = vmatpush1.bf16.msra.mxu0 %v1248
        %1262 = vmatprep.subr.bf16.mxu0 0
        %1263 = vmatpush1.bf16.msra.mxu0 0
        %1264 = vmatprep.subr.bf16.mxu0 0
        %1265 = vmatpush1.bf16.msra.mxu0 0
        %1266 = vmatprep.subr.bf16.mxu0 0
        %1267 = vmatpush1.bf16.msra.mxu0 0
        %1268 = vmatprep.subr.bf16.mxu0 0
        %1269 = vmatpush1.bf16.msra.mxu0 0
        %1270 = vmatprep.subr.bf16.mxu0 0
        %1271 = vmatpush1.bf16.msra.mxu0 0
        %1272 = vmatprep.subr.bf16.mxu0 0
        %1273 = vmatpush1.bf16.msra.mxu0 0
        %1274 = vmatprep.subr.bf16.mxu0 0
        %1275 = vmatpush1.bf16.msra.mxu0 0
        %1276 = vmatprep.subr.bf16.mxu0 0
        %1277 = vmatpush1.bf16.msra.mxu0 0
        %1278 = vmatprep.subr.bf16.mxu0 0
        %1279 = vmatpush1.bf16.msra.mxu0 0
        %1280 = vmatprep.subr.bf16.mxu0 0
        %1281 = vmatpush1.bf16.msra.mxu0 0
        %1282 = vmatprep.subr.bf16.mxu0 0
        %1283 = vmatpush1.bf16.msra.mxu0 0
        %1284 = vmatprep.subr.bf16.mxu0 0
        %1285 = vmatpush1.bf16.msra.mxu0 0
        %1286 = vmatprep.subr.bf16.mxu0 0
        %1287 = vmatpush1.bf16.msra.mxu0 0
        %1288 = vmatprep.subr.bf16.mxu0 0
        %1289 = vmatpush1.bf16.msra.mxu0 0
        %1290 = vmatprep.mubr.bf16.mxu0 0
        %1291 = vmatmul.mubr.bf16.gmra.mrb[0].mxu0 %v1256
        %v1292 = vpop.f32.mrb[0].mxu0
        %v1293 = vadd.f32 %v1253, %v1292
        %v1294 = vpop.f32.mrb[0].mxu0
        %v1295 = vpop.f32.mrb[0].mxu0
        %v1296 = vpop.f32.mrb[0].mxu0
        %1297 = vdwg.mxu0
        %v1298 = vmul.f32 %v1160, 1.0033838
        %v1299 = vsub.f32 %v1298, %v1293
        %v1300 = vpack.c.bf16 %v1299, %v1299
        %v1302 = vsel %vm317, %v1300, 0
        %1304 = vmatprep.subr.bf16.mxu0 0
        %1305 = vmatpush1.bf16.msra.mxu0 %v1302
        %1306 = vmatprep.subr.bf16.mxu0 0
        %1307 = vmatpush1.bf16.msra.mxu0 0
        %1308 = vmatprep.subr.bf16.mxu0 0
        %1309 = vmatpush1.bf16.msra.mxu0 0
        %1310 = vmatprep.subr.bf16.mxu0 0
        %1311 = vmatpush1.bf16.msra.mxu0 0
        %1312 = vmatprep.subr.bf16.mxu0 0
        %1313 = vmatpush1.bf16.msra.mxu0 0
        %1314 = vmatprep.subr.bf16.mxu0 0
        %1315 = vmatpush1.bf16.msra.mxu0 0
        %1316 = vmatprep.subr.bf16.mxu0 0
        %1317 = vmatpush1.bf16.msra.mxu0 0
        %1318 = vmatprep.subr.bf16.mxu0 0
        %1319 = vmatpush1.bf16.msra.mxu0 0
        %1320 = vmatprep.subr.bf16.mxu0 0
        %1321 = vmatpush1.bf16.msra.mxu0 0
        %1322 = vmatprep.subr.bf16.mxu0 0
        %1323 = vmatpush1.bf16.msra.mxu0 0
        %1324 = vmatprep.subr.bf16.mxu0 0
        %1325 = vmatpush1.bf16.msra.mxu0 0
        %1326 = vmatprep.subr.bf16.mxu0 0
        %1327 = vmatpush1.bf16.msra.mxu0 0
        %1328 = vmatprep.subr.bf16.mxu0 0
        %1329 = vmatpush1.bf16.msra.mxu0 0
        %1330 = vmatprep.subr.bf16.mxu0 0
        %1331 = vmatpush1.bf16.msra.mxu0 0
        %1332 = vmatprep.subr.bf16.mxu0 0
        %1333 = vmatpush1.bf16.msra.mxu0 0
        %1334 = vmatprep.subr.bf16.mxu0 0
        %1335 = vmatpush1.bf16.msra.mxu0 0
        %1336 = vmatprep.mubr.bf16.mxu0 0
        %1337 = vmatmul.mubr.bf16.gmra.mrb[0].mxu0 %v312
        %v1338 = vpop.f32.mrb[0].mxu0
        %v1339 = vadd.f32 %v283, %v1338
        %v1340 = vpop.f32.mrb[0].mxu0
        %v1341 = vpop.f32.mrb[0].mxu0
        %v1342 = vadd.f32 %v288, %v1341
        %v1343 = vpop.f32.mrb[0].mxu0
        %1344 = vmatprep.mubr.bf16.mxu0 0
        %1345 = vmatmul.mubr.bf16.gmra.mrb[0].mxu0 %v315
        %v1346 = vpop.f32.mrb[0].mxu0
        %v1347 = vadd.f32 %v293, %v1346
        %v1348 = vpop.f32.mrb[0].mxu0
        %v1349 = vpop.f32.mrb[0].mxu0
        %v1350 = vadd.f32 %v298, %v1349
        %v1351 = vpop.f32.mrb[0].mxu0
        %1352 = vdwg.mxu0
        %v1353 = vmul.f32 %v1339, %v1339
        %v1354 = vmul.f32 %v1342, %v1342
        %v1355 = vmul.f32 %v1347, %v1347
        %v1356 = vmul.f32 %v1350, %v1350
        %v1357 = vmul.f32 %v1353, 0.035677407
        %v1358 = vmul.f32 %v1354, 0.035677407
        %v1359 = vmul.f32 %v1355, 0.035677407
        %v1360 = vmul.f32 %v1356, 0.035677407
        %v1361 = vadd.f32 %v1357, 0.7978846
        %v1362 = vadd.f32 %v1358, 0.7978846
        %v1363 = vadd.f32 %v1359, 0.7978846
        %v1364 = vadd.f32 %v1360, 0.7978846
        %v1365 = vmul.f32 %v1339, %v1361
        %v1366 = vmul.f32 %v1342, %v1362
        %v1367 = vmul.f32 %v1347, %v1363
        %v1368 = vmul.f32 %v1350, %v1364
        %v1369 = vtanh.pop %v1365
        %v1370 = vtanh.pop %v1366
        %v1371 = vtanh.pop %v1367
        %v1372 = vtanh.pop %v1368
        %v1373 = vmul.f32 %v1369, 0.5
        %v1374 = vmul.f32 %v1370, 0.5
        %v1375 = vmul.f32 %v1371, 0.5
        %v1376 = vmul.f32 %v1372, 0.5
        %v1377 = vadd.f32 %v1373, 0.5
        %v1378 = vadd.f32 %v1374, 0.5
        %v1379 = vadd.f32 %v1375, 0.5
        %v1380 = vadd.f32 %v1376, 0.5
        %v1381 = vmul.f32 %v1339, %v1377
        %v1382 = vmul.f32 %v1342, %v1378
        %v1383 = vmul.f32 %v1347, %v1379
        %v1384 = vmul.f32 %v1350, %v1380
        %v1385 = vld [vmem:[%s824] sm:$0x3]
        %v1386 = vpack.c.bf16 %v1382, %v1381
        %v1387 = vpack.c.bf16 %v1384, %v1383
        %v1388 = vld [vmem:[%s828] sm:$0xf]
        %1390 = vset.pattern.permute.xlu0 0
        %1391 = vperm.xlu0 %1390, %v1388
        %v1392 = vpop.permute.xlu0 %1391
        %v1395 = vsel %vm411, %v1385, 0
        %1397 = vmatprep.subr.bf16.mxu0 0
        %1398 = vmatpush1.bf16.msra.mxu0 %v1386
        %1399 = vmatprep.subr.bf16.mxu0 0
        %1400 = vmatpush1.bf16.msra.mxu0 %v1387
        %1401 = vmatprep.subr.bf16.mxu0 0
        %1402 = vmatpush1.bf16.msra.mxu0 0
        %1403 = vmatprep.subr.bf16.mxu0 0
        %1404 = vmatpush1.bf16.msra.mxu0 0
        %1405 = vmatprep.subr.bf16.mxu0 0
        %1406 = vmatpush1.bf16.msra.mxu0 0
        %1407 = vmatprep.subr.bf16.mxu0 0
        %1408 = vmatpush1.bf16.msra.mxu0 0
        %1409 = vmatprep.subr.bf16.mxu0 0
        %1410 = vmatpush1.bf16.msra.mxu0 0
        %1411 = vmatprep.subr.bf16.mxu0 0
        %1412 = vmatpush1.bf16.msra.mxu0 0
        %1413 = vmatprep.subr.bf16.mxu0 0
        %1414 = vmatpush1.bf16.msra.mxu0 0
        %1415 = vmatprep.subr.bf16.mxu0 0
        %1416 = vmatpush1.bf16.msra.mxu0 0
        %1417 = vmatprep.subr.bf16.mxu0 0
        %1418 = vmatpush1.bf16.msra.mxu0 0
        %1419 = vmatprep.subr.bf16.mxu0 0
        %1420 = vmatpush1.bf16.msra.mxu0 0
        %1421 = vmatprep.subr.bf16.mxu0 0
        %1422 = vmatpush1.bf16.msra.mxu0 0
        %1423 = vmatprep.subr.bf16.mxu0 0
        %1424 = vmatpush1.bf16.msra.mxu0 0
        %1425 = vmatprep.subr.bf16.mxu0 0
        %1426 = vmatpush1.bf16.msra.mxu0 0
        %1427 = vmatprep.subr.bf16.mxu0 0
        %1428 = vmatpush1.bf16.msra.mxu0 0
        %1429 = vmatprep.mubr.bf16.mxu0 0
        %1430 = vmatmul.mubr.bf16.gmra.mrb[0].mxu0 %v1395
        %v1431 = vpop.f32.mrb[0].mxu0
        %v1432 = vadd.f32 %v1392, %v1431
        %v1433 = vpop.f32.mrb[0].mxu0
        %v1434 = vpop.f32.mrb[0].mxu0
        %v1435 = vpop.f32.mrb[0].mxu0
        %1436 = vdwg.mxu0
        %v1437 = vmul.f32 %v1299, 1.00005
        %v1438 = vsub.f32 %v1437, %v1432
        %s1439 = scalar_lea.vmem %s268, 4 [#allocation5]
        %1440 = vst [vmem:[%s1439] sm:$0xf] %v1438
        %s1441 = sand.u32 %s162, 1
        %s1442 = scalar_lea.sflag [#allocation4], %s1441
        %s1443 = sand.u32 %s162, 1
        %s1444 = smul.addr %s1443, 8
        %s1445 = scalar_lea.vmem [#allocation5], %s1444
        // Predicated region
        $region49: #{tpu_custom_call.1} parent=43 // pred_check
          %p1446 = pneg %p172
        $region50: #{tpu_custom_call.1} parent=43 // pred_check_branch
          %1448 = sbr.rel (%p1446) target = $region52
        $region51: #{tpu_custom_call.1} parent=43 // pred_region
          %s1450 = ssub.s32 128, 128
          %1451 = vsyncadd %s1442, %s1450
          %s1452 = smul.addr %s23, 64
          %s1453 = scalar_lea.hbm %s6, %s1452
          %s1454 = sshll.u32 %s1445, 4
          %s1455 = int_to_ptr.vmem [resolvable:$true] %s1454
          %1460 = dma.vmem_to_hbm [thread:$0]  %s1455, 128, %s1453, %s1442, 64, 128, 4
        $region52: #{tpu_custom_call.1} parent=43 // pred_fallthru
          _
      $region44: #{tpu_custom_call.1} parent=5 // pred_fallthru
        _
      %p1461 = scmp.le.s32.totalorder 2, %s18
      // Predicated region
      $region53: #{tpu_custom_call.1} parent=5 // pred_check
        %p1462 = pneg %p1461
      $region54: #{tpu_custom_call.1} parent=5 // pred_check_branch
        %1464 = sbr.rel (%p1462) target = $region56
      $region55: #{tpu_custom_call.1} parent=5 // pred_region
        %s1465 = ssub.s32 %s18, 2
        // Predicated region
        $region57: #{tpu_custom_call.1} parent=55 // pred_check
          %p1466 = pneg %p178
        $region58: #{tpu_custom_call.1} parent=55 // pred_check_branch
          %1468 = sbr.rel (%p1466) target = $region60
        $region59: #{tpu_custom_call.1} parent=55 // pred_region
          %s1469 = sand.u32 %s163, 1
          %s1470 = scalar_lea.sflag [#allocation4], %s1469
          %s1471 = sand.u32 %s163, 1
          %s1472 = smul.addr %s1471, 8
          %s1473 = scalar_lea.vmem [#allocation5], %s1472
          %1474 = dma.done %s1470, 128
        $region60: #{tpu_custom_call.1} parent=55 // pred_fallthru
          _
      $region56: #{tpu_custom_call.1} parent=5 // pred_fallthru
        _
    $region6: #{tpu_custom_call.1} parent=1 // loop_footer
      %s22 = sadd.s32 1, %s18
    $region7: #{tpu_custom_call.1} parent=1 // loop_footer_branch
      %17 = sbr.rel target = $region3
    $region8: #{tpu_custom_call.1} parent=1 // loop_exit
      _
    %1475 = vsyncpa [#allocation3], 1
    %s1476 = scalar_lea.sflag [#allocation3], 1
    %1477 = vsyncpa %s1476, 1
    %1478 = vsyncpa [#allocation4], 1
    %s1479 = scalar_lea.sflag [#allocation4], 1
    %1480 = vsyncpa %s1479, 1

</llo_original>
